<compile_context>
chip_gen: v7x
topology: tpu7x:2x2x1
jax: 0.10.0
libtpu: 0.0.40
codegen_flags: <defaults>
</compile_context>

<pallas_src>
import functools

import jax
import jax.numpy as jnp
from jax.experimental import pallas as pl
from jax.experimental.pallas import tpu as pltpu

LATENT_DIM = 20
IN_DIM = 28 * 28
HID_DIM = 400
MAX_BATCH_TILE = 256  # multiple of 8; fits v5e/v6e/v7x VMEM comfortably


def _round_up(n, m):
    return ((n + m - 1) // m) * m


def _vae_kernel(
    x_ref,      # (TB, 784)      bf16
    w1_ref,     # (784, 400)     bf16
    b1_ref,     # (1, 400)       f32
    w2_ref,     # (400, 2L)      bf16   fused mu/logvar head
    b2_ref,     # (1, 2L)        f32
    w3_ref,     # (L, 400)       bf16
    b3_ref,     # (1, 400)       f32
    w4_ref,     # (400, 784)     bf16
    b4_ref,     # (1, 784)       f32
    eps_ref,    # (TB, L)        f32
    recon_ref,  # (TB, 784)      f32 out
    mlz_ref,    # (TB, 3L)       f32 out  [mu | logvar | z]
    *,
    latent_dim,
):
    x = x_ref[...]  # bf16

    # ---- encoder ----
    h1 = jnp.dot(x, w1_ref[...], preferred_element_type=jnp.float32) + b1_ref[...]
    h1 = jnp.maximum(h1, 0.0).astype(jnp.bfloat16)  # ReLU, bf16 for next MXU pass

    enc = jnp.dot(h1, w2_ref[...], preferred_element_type=jnp.float32) + b2_ref[...]
    mu = enc[:, :latent_dim]
    logvar = enc[:, latent_dim:]

    # ---- reparameterize ----
    std = jnp.exp(0.5 * logvar)
    z = mu + eps_ref[...] * std

    # ---- decoder ----
    h3 = (
        jnp.dot(z.astype(jnp.bfloat16), w3_ref[...], preferred_element_type=jnp.float32)
        + b3_ref[...]
    )
    h3 = jnp.maximum(h3, 0.0).astype(jnp.bfloat16)  # ReLU

    logits = jnp.dot(h3, w4_ref[...], preferred_element_type=jnp.float32) + b4_ref[...]
    # sigmoid = 1 / (1 + exp(-x)); exp + reciprocal both route to the EUP slot.
    recon = pl.reciprocal(1.0 + jnp.exp(-logits), approx=True)

    recon_ref[...] = recon
    mlz_ref[...] = jnp.concatenate([mu, logvar, z], axis=-1)


@functools.partial(jax.jit, static_argnames=("latent_dim",))
def vae_forward(x_img, params, eps, latent_dim=LATENT_DIM):
    """x_img: (B, 1, 28, 28) float32 (NCHW, like the PyTorch module)."""
    b = x_img.shape[0]
    x_flat = x_img.reshape(b, -1).astype(jnp.bfloat16)  # Flatten() + bf16 cast (glue)
    eps_f32 = eps.astype(jnp.float32)

    # Batch tile: multiple of 8, at most MAX_BATCH_TILE. Pad batch so the grid
    # divides exactly (no partial blocks); padded rows are sliced off below.
    tb = min(MAX_BATCH_TILE, _round_up(max(b, 1), 8))
    b_pad = _round_up(b, tb)
    if b_pad != b:
        x_flat = jnp.pad(x_flat, ((0, b_pad - b), (0, 0)))
        eps_f32 = jnp.pad(eps_f32, ((0, b_pad - b), (0, 0)))
    num_tiles = b_pad // tb

    l2 = 2 * latent_dim
    l3 = 3 * latent_dim

    def _batched(cols):
        return pl.BlockSpec((tb, cols), lambda i: (i, 0))

    def _resident(shape):
        return pl.BlockSpec(shape, lambda i: (0, 0))

    bf16_bytes = 2
    f32_bytes = 4
    weight_bytes = (IN_DIM * HID_DIM + HID_DIM * l2 + latent_dim * HID_DIM + HID_DIM * IN_DIM) * bf16_bytes
    bias_bytes = (HID_DIM + l2 + HID_DIM + IN_DIM) * f32_bytes
    io_bytes = b_pad * (IN_DIM * bf16_bytes + IN_DIM * f32_bytes + latent_dim * f32_bytes + l3 * f32_bytes)
    cost = pl.CostEstimate(
        flops=2 * b_pad * (IN_DIM * HID_DIM + HID_DIM * l2 + latent_dim * HID_DIM + HID_DIM * IN_DIM),
        transcendentals=b_pad * (IN_DIM + latent_dim),
        bytes_accessed=weight_bytes + bias_bytes + io_bytes,
    )

    recon, mlz = pl.pallas_call(
        functools.partial(_vae_kernel, latent_dim=latent_dim),
        grid=(num_tiles,),
        in_specs=[
            _batched(IN_DIM),                 # x
            _resident((IN_DIM, HID_DIM)),     # w1
            _resident((1, HID_DIM)),          # b1
            _resident((HID_DIM, l2)),         # w2 (fused mu/logvar head)
            _resident((1, l2)),               # b2
            _resident((latent_dim, HID_DIM)), # w3
            _resident((1, HID_DIM)),          # b3
            _resident((HID_DIM, IN_DIM)),     # w4
            _resident((1, IN_DIM)),           # b4
            _batched(latent_dim),             # eps
        ],
        out_specs=(
            _batched(IN_DIM),                 # recon
            _batched(l3),                     # packed [mu | logvar | z]
        ),
        out_shape=(
            jax.ShapeDtypeStruct((b_pad, IN_DIM), jnp.float32),
            jax.ShapeDtypeStruct((b_pad, l3), jnp.float32),
        ),
        compiler_params=pltpu.CompilerParams(
            dimension_semantics=("parallel",),
            vmem_limit_bytes=32 * 1024 * 1024,
        ),
        cost_estimate=cost,
    )(
        x_flat,
        params["w1"], params["b1"],
        params["w2"], params["b2"],
        params["w3"], params["b3"],
        params["w4"], params["b4"],
        eps_f32,
    )

    recon = recon[:b]
    mlz = mlz[:b]
    mu = mlz[:, :latent_dim]
    logvar = mlz[:, latent_dim:2 * latent_dim]
    z = mlz[:, 2 * latent_dim:]

    # reshape(-1, 28, 28) then unsqueeze(1)  -> (B, 1, 28, 28)
    x_reconstructed = recon.reshape(-1, 28, 28)[:, None, :, :]
    return x_reconstructed, mu, logvar, z


def init_params(key, latent_dim=LATENT_DIM):
    """PyTorch-Linear-style init: U(-1/sqrt(fan_in), 1/sqrt(fan_in)).

    Weights are stored (in_features, out_features) in bf16 (kernel does x @ W
    with f32 accumulation); biases stay f32, shaped (1, out_features).
    The mu/logvar head is kept FUSED as a single (400, 2*latent) weight.
    """
    def linear(k, fan_in, fan_out):
        kw, kb = jax.random.split(k)
        bound = 1.0 / jnp.sqrt(fan_in)
        w = jax.random.uniform(kw, (fan_in, fan_out), jnp.float32, -bound, bound)
        b = jax.random.uniform(kb, (1, fan_out), jnp.float32, -bound, bound)
        return w.astype(jnp.bfloat16), b

    k1, k2, k3, k4 = jax.random.split(key, 4)
    w1, b1 = linear(k1, IN_DIM, HID_DIM)            # encoder Linear(784, 400)
    w2, b2 = linear(k2, HID_DIM, 2 * latent_dim)    # encoder Linear(400, 2*latent)
    w3, b3 = linear(k3, latent_dim, HID_DIM)        # decoder Linear(latent, 400)
    w4, b4 = linear(k4, HID_DIM, IN_DIM)            # decoder Linear(400, 784)

    return {
        "w1": w1, "b1": b1,
        "w2": w2, "b2": b2,
        "w3": w3, "b3": b3,
        "w4": w4, "b4": b4,
    }


def _reference_forward(x_img, params, eps, latent_dim=LATENT_DIM):
    """Pure-JAX reference mirroring the kernel's bf16-matmul / f32-accumulate numerics."""
    b = x_img.shape[0]
    x = x_img.reshape(b, -1).astype(jnp.bfloat16)
    h1 = jnp.dot(x, params["w1"], preferred_element_type=jnp.float32) + params["b1"]
    h1 = jnp.maximum(h1, 0.0).astype(jnp.bfloat16)
    enc = jnp.dot(h1, params["w2"], preferred_element_type=jnp.float32) + params["b2"]
    mu, logvar = enc[:, :latent_dim], enc[:, latent_dim:]
    z = mu + eps * jnp.exp(0.5 * logvar)
    h3 = jnp.dot(z.astype(jnp.bfloat16), params["w3"], preferred_element_type=jnp.float32) + params["b3"]
    h3 = jnp.maximum(h3, 0.0).astype(jnp.bfloat16)
    logits = jnp.dot(h3, params["w4"], preferred_element_type=jnp.float32) + params["b4"]
    recon = jax.nn.sigmoid(logits)
    return recon.reshape(-1, 28, 28)[:, None, :, :], mu, logvar, z


if __name__ == "__main__":
    key = jax.random.PRNGKey(0)
    k_params, k_x, k_eps = jax.random.split(key, 3)

    batch = 2
    x = jax.random.uniform(k_x, (batch, 1, 28, 28), jnp.float32)   # NCHW input
    params = init_params(k_params)
    # torch.randn_like(std) -> external standard-normal noise (deterministic here)
    eps = jax.random.normal(k_eps, (batch, LATENT_DIM), jnp.float32)

    out = vae_forward(x, params, eps)
    out = jax.block_until_ready(out)
    x_rec, mu, logvar, z = out

    # sanity-check against pure-JAX reference (same bf16/f32 numerics; tolerance
    # absorbs the approx-EUP reciprocal in the sigmoid and exp impl differences)
    ref = _reference_forward(x, params, eps)
    for got, want in zip(out, ref):
        assert got.shape == want.shape
        assert jnp.max(jnp.abs(got.astype(jnp.float32) - want.astype(jnp.float32))) < 2e-2

    assert x_rec.shape == (batch, 1, 28, 28)
    assert mu.shape == (batch, LATENT_DIM)
    assert logvar.shape == (batch, LATENT_DIM)
    assert z.shape == (batch, LATENT_DIM)

    print("KERNEL_OK")
</pallas_src>

<mosaic_0001>
module attributes {stable_mosaic.version = 11 : i64} {
  func.func @_vae_kernel(%arg0: i32, %arg1: memref<8x784xbf16, #tpu.memory_space<vmem>>, %arg2: memref<784x400xbf16, #tpu.memory_space<vmem>>, %arg3: memref<1x400xf32, #tpu.memory_space<vmem>>, %arg4: memref<400x40xbf16, #tpu.memory_space<vmem>>, %arg5: memref<1x40xf32, #tpu.memory_space<vmem>>, %arg6: memref<20x400xbf16, #tpu.memory_space<vmem>>, %arg7: memref<1x400xf32, #tpu.memory_space<vmem>>, %arg8: memref<400x784xbf16, #tpu.memory_space<vmem>>, %arg9: memref<1x784xf32, #tpu.memory_space<vmem>>, %arg10: memref<8x20xf32, #tpu.memory_space<vmem>>, %arg11: memref<8x784xf32, #tpu.memory_space<vmem>>, %arg12: memref<8x60xf32, #tpu.memory_space<vmem>>) attributes {dimension_semantics = [#tpu.dimension_semantics<parallel>], iteration_bounds = array<i64: 1>, scalar_prefetch = 0 : i64, scratch_operands = 0 : i64, tpu.core_type = #tpu.core_type<tc>, window_params = [{transform_indices = @transform_0, window_bounds = array<i64: 8, 784>}, {pipeline_mode = #tpu.pipeline_mode<synchronous>, transform_indices = @transform_1, window_bounds = array<i64: 784, 400>}, {pipeline_mode = #tpu.pipeline_mode<synchronous>, transform_indices = @transform_2, window_bounds = array<i64: 1, 400>}, {pipeline_mode = #tpu.pipeline_mode<synchronous>, transform_indices = @transform_3, window_bounds = array<i64: 400, 40>}, {pipeline_mode = #tpu.pipeline_mode<synchronous>, transform_indices = @transform_4, window_bounds = array<i64: 1, 40>}, {pipeline_mode = #tpu.pipeline_mode<synchronous>, transform_indices = @transform_5, window_bounds = array<i64: 20, 400>}, {pipeline_mode = #tpu.pipeline_mode<synchronous>, transform_indices = @transform_6, window_bounds = array<i64: 1, 400>}, {pipeline_mode = #tpu.pipeline_mode<synchronous>, transform_indices = @transform_7, window_bounds = array<i64: 400, 784>}, {pipeline_mode = #tpu.pipeline_mode<synchronous>, transform_indices = @transform_8, window_bounds = array<i64: 1, 784>}, {transform_indices = @transform_9, window_bounds = array<i64: 8, 20>}, {transform_indices = @transform_10, window_bounds = array<i64: 8, 784>}, {transform_indices = @transform_11, window_bounds = array<i64: 8, 60>}]} {
    %c0 = arith.constant 0 : index
    %c0_0 = arith.constant 0 : index
    %0 = vector.load %arg1[%c0, %c0_0] : memref<8x784xbf16, #tpu.memory_space<vmem>>, vector<8x784xbf16>
    %c0_1 = arith.constant 0 : index
    %c0_2 = arith.constant 0 : index
    %1 = vector.load %arg2[%c0_1, %c0_2] : memref<784x400xbf16, #tpu.memory_space<vmem>>, vector<784x400xbf16>
    %cst = arith.constant dense<0.000000e+00> : vector<8x400xf32>
    %2 = tpu.matmul %0, %1, %cst {dimension_numbers = #tpu.dot_dimension_numbers<[1], [0], [0], [1], [0, 0, 1, 1], [], []>} : vector<8x784xbf16>, vector<784x400xbf16>, vector<8x400xf32> -> vector<8x400xf32>
    %c0_3 = arith.constant 0 : index
    %c0_4 = arith.constant 0 : index
    %3 = vector.load %arg3[%c0_3, %c0_4] : memref<1x400xf32, #tpu.memory_space<vmem>>, vector<1x400xf32>
    %4 = vector.broadcast %3 : vector<1x400xf32> to vector<8x400xf32>
    %5 = arith.addf %2, %4 : vector<8x400xf32>
    %cst_5 = arith.constant 0.000000e+00 : f32
    %6 = vector.broadcast %cst_5 : f32 to vector<8x400xf32>
    %7 = arith.maximumf %5, %6 : vector<8x400xf32>
    %8 = arith.truncf %7 : vector<8x400xf32> to vector<8x400xbf16>
    %c0_6 = arith.constant 0 : index
    %c0_7 = arith.constant 0 : index
    %9 = vector.load %arg4[%c0_6, %c0_7] : memref<400x40xbf16, #tpu.memory_space<vmem>>, vector<400x40xbf16>
    %cst_8 = arith.constant dense<0.000000e+00> : vector<8x40xf32>
    %10 = tpu.matmul %8, %9, %cst_8 {dimension_numbers = #tpu.dot_dimension_numbers<[1], [0], [0], [1], [0, 0, 1, 1], [], []>} : vector<8x400xbf16>, vector<400x40xbf16>, vector<8x40xf32> -> vector<8x40xf32>
    %c0_9 = arith.constant 0 : index
    %c0_10 = arith.constant 0 : index
    %11 = vector.load %arg5[%c0_9, %c0_10] : memref<1x40xf32, #tpu.memory_space<vmem>>, vector<1x40xf32>
    %12 = vector.broadcast %11 : vector<1x40xf32> to vector<8x40xf32>
    %13 = arith.addf %10, %12 : vector<8x40xf32>
    %14 = vector.extract_strided_slice %13 {offsets = [0, 0], sizes = [8, 20], strides = [1, 1]} : vector<8x40xf32> to vector<8x20xf32>
    %15 = vector.extract_strided_slice %13 {offsets = [0, 20], sizes = [8, 20], strides = [1, 1]} : vector<8x40xf32> to vector<8x20xf32>
    %cst_11 = arith.constant 5.000000e-01 : f32
    %16 = vector.broadcast %cst_11 : f32 to vector<8x20xf32>
    %17 = arith.mulf %16, %15 : vector<8x20xf32>
    %18 = math.exp %17 : vector<8x20xf32>
    %c0_12 = arith.constant 0 : index
    %c0_13 = arith.constant 0 : index
    %19 = vector.load %arg10[%c0_12, %c0_13] : memref<8x20xf32, #tpu.memory_space<vmem>>, vector<8x20xf32>
    %20 = arith.mulf %19, %18 : vector<8x20xf32>
    %21 = arith.addf %14, %20 : vector<8x20xf32>
    %22 = arith.truncf %21 : vector<8x20xf32> to vector<8x20xbf16>
    %c0_14 = arith.constant 0 : index
    %c0_15 = arith.constant 0 : index
    %23 = vector.load %arg6[%c0_14, %c0_15] : memref<20x400xbf16, #tpu.memory_space<vmem>>, vector<20x400xbf16>
    %cst_16 = arith.constant dense<0.000000e+00> : vector<8x400xf32>
    %24 = tpu.matmul %22, %23, %cst_16 {dimension_numbers = #tpu.dot_dimension_numbers<[1], [0], [0], [1], [0, 0, 1, 1], [], []>} : vector<8x20xbf16>, vector<20x400xbf16>, vector<8x400xf32> -> vector<8x400xf32>
    %c0_17 = arith.constant 0 : index
    %c0_18 = arith.constant 0 : index
    %25 = vector.load %arg7[%c0_17, %c0_18] : memref<1x400xf32, #tpu.memory_space<vmem>>, vector<1x400xf32>
    %26 = vector.broadcast %25 : vector<1x400xf32> to vector<8x400xf32>
    %27 = arith.addf %24, %26 : vector<8x400xf32>
    %cst_19 = arith.constant 0.000000e+00 : f32
    %28 = vector.broadcast %cst_19 : f32 to vector<8x400xf32>
    %29 = arith.maximumf %27, %28 : vector<8x400xf32>
    %30 = arith.truncf %29 : vector<8x400xf32> to vector<8x400xbf16>
    %c0_20 = arith.constant 0 : index
    %c0_21 = arith.constant 0 : index
    %31 = vector.load %arg8[%c0_20, %c0_21] : memref<400x784xbf16, #tpu.memory_space<vmem>>, vector<400x784xbf16>
    %cst_22 = arith.constant dense<0.000000e+00> : vector<8x784xf32>
    %32 = tpu.matmul %30, %31, %cst_22 {dimension_numbers = #tpu.dot_dimension_numbers<[1], [0], [0], [1], [0, 0, 1, 1], [], []>} : vector<8x400xbf16>, vector<400x784xbf16>, vector<8x784xf32> -> vector<8x784xf32>
    %c0_23 = arith.constant 0 : index
    %c0_24 = arith.constant 0 : index
    %33 = vector.load %arg9[%c0_23, %c0_24] : memref<1x784xf32, #tpu.memory_space<vmem>>, vector<1x784xf32>
    %34 = vector.broadcast %33 : vector<1x784xf32> to vector<8x784xf32>
    %35 = arith.addf %32, %34 : vector<8x784xf32>
    %cst_25 = arith.constant 0.000000e+00 : f32
    %36 = vector.broadcast %cst_25 : f32 to vector<8x784xf32>
    %37 = arith.subf %36, %35 : vector<8x784xf32>
    %38 = math.exp %37 : vector<8x784xf32>
    %cst_26 = arith.constant 1.000000e+00 : f32
    %39 = vector.broadcast %cst_26 : f32 to vector<8x784xf32>
    %40 = arith.addf %39, %38 : vector<8x784xf32>
    %41 = tpu.reciprocal %40 {approx = true} : vector<8x784xf32> -> vector<8x784xf32>
    %c0_27 = arith.constant 0 : index
    %c0_28 = arith.constant 0 : index
    %42 = vector.load %arg11[%c0_27, %c0_28] : memref<8x784xf32, #tpu.memory_space<vmem>>, vector<8x784xf32>
    tpu.vector_store %arg11[%c0_27, %c0_28], %41 {strides = array<i32>} : memref<8x784xf32, #tpu.memory_space<vmem>>, vector<8x784xf32>,
    %43 = tpu.concatenate %14, %15, %21 in 1 : vector<8x20xf32>, vector<8x20xf32>, vector<8x20xf32> -> vector<8x60xf32>
    %c0_29 = arith.constant 0 : index
    %c0_30 = arith.constant 0 : index
    %44 = vector.load %arg12[%c0_29, %c0_30] : memref<8x60xf32, #tpu.memory_space<vmem>>, vector<8x60xf32>
    tpu.vector_store %arg12[%c0_29, %c0_30], %43 {strides = array<i32>} : memref<8x60xf32, #tpu.memory_space<vmem>>, vector<8x60xf32>,
    return
  }
  func.func @transform_0(%arg0: i32) -> (i32, i32) {
    %c0_i32 = arith.constant 0 : i32
    %c0_i32_0 = arith.constant 0 : i32
    return %arg0, %c0_i32 : i32, i32
  }
  func.func @transform_1(%arg0: i32) -> (i32, i32) {
    %c0_i32 = arith.constant 0 : i32
    %c0_i32_0 = arith.constant 0 : i32
    %c0_i32_1 = arith.constant 0 : i32
    return %c0_i32, %c0_i32_0 : i32, i32
  }
  func.func @transform_2(%arg0: i32) -> (i32, i32) {
    %c0_i32 = arith.constant 0 : i32
    %c0_i32_0 = arith.constant 0 : i32
    %c0_i32_1 = arith.constant 0 : i32
    return %c0_i32, %c0_i32_0 : i32, i32
  }
  func.func @transform_3(%arg0: i32) -> (i32, i32) {
    %c0_i32 = arith.constant 0 : i32
    %c0_i32_0 = arith.constant 0 : i32
    %c0_i32_1 = arith.constant 0 : i32
    return %c0_i32, %c0_i32_0 : i32, i32
  }
  func.func @transform_4(%arg0: i32) -> (i32, i32) {
    %c0_i32 = arith.constant 0 : i32
    %c0_i32_0 = arith.constant 0 : i32
    %c0_i32_1 = arith.constant 0 : i32
    return %c0_i32, %c0_i32_0 : i32, i32
  }
  func.func @transform_5(%arg0: i32) -> (i32, i32) {
    %c0_i32 = arith.constant 0 : i32
    %c0_i32_0 = arith.constant 0 : i32
    %c0_i32_1 = arith.constant 0 : i32
    return %c0_i32, %c0_i32_0 : i32, i32
  }
  func.func @transform_6(%arg0: i32) -> (i32, i32) {
    %c0_i32 = arith.constant 0 : i32
    %c0_i32_0 = arith.constant 0 : i32
    %c0_i32_1 = arith.constant 0 : i32
    return %c0_i32, %c0_i32_0 : i32, i32
  }
  func.func @transform_7(%arg0: i32) -> (i32, i32) {
    %c0_i32 = arith.constant 0 : i32
    %c0_i32_0 = arith.constant 0 : i32
    %c0_i32_1 = arith.constant 0 : i32
    return %c0_i32, %c0_i32_0 : i32, i32
  }
  func.func @transform_8(%arg0: i32) -> (i32, i32) {
    %c0_i32 = arith.constant 0 : i32
    %c0_i32_0 = arith.constant 0 : i32
    %c0_i32_1 = arith.constant 0 : i32
    return %c0_i32, %c0_i32_0 : i32, i32
  }
  func.func @transform_9(%arg0: i32) -> (i32, i32) {
    %c0_i32 = arith.constant 0 : i32
    %c0_i32_0 = arith.constant 0 : i32
    return %arg0, %c0_i32 : i32, i32
  }
  func.func @transform_10(%arg0: i32) -> (i32, i32) {
    %c0_i32 = arith.constant 0 : i32
    %c0_i32_0 = arith.constant 0 : i32
    return %arg0, %c0_i32 : i32, i32
  }
  func.func @transform_11(%arg0: i32) -> (i32, i32) {
    %c0_i32 = arith.constant 0 : i32
    %c0_i32_0 = arith.constant 0 : i32
    return %arg0, %c0_i32 : i32, i32
  }
}

</mosaic_0001>

<llo_original>
// kernel: vae_forward.1
$region0: #{vae_forward.1}
  #allocation0 [shape = 'u32[]', space=smem, size = 0x4, offset = 0x4, fixed_abs, tag = 'smem constant byte address 0x4 - core index']
  #allocation1 [shape = 'u32[144,128]{1,0:T(1,128)}', space=vmem, size = 0x12000, scoped, tag = 'internal scratch']
  %s0 = inlined_call_operand.vmem [shape: bf16[8,784], index: 0, kind: input, shape index: {}]
  %s1 = inlined_call_operand.vmem [shape: bf16[784,400], index: 1, kind: input, shape index: {}]
  %s2 = inlined_call_operand.vmem [shape: f32[1,400], index: 2, kind: input, shape index: {}]
  %s3 = inlined_call_operand.vmem [shape: bf16[400,40], index: 3, kind: input, shape index: {}]
  %s4 = inlined_call_operand.vmem [shape: f32[1,40], index: 4, kind: input, shape index: {}]
  %s5 = inlined_call_operand.vmem [shape: bf16[20,400], index: 5, kind: input, shape index: {}]
  %s6 = inlined_call_operand.vmem [shape: f32[1,400], index: 6, kind: input, shape index: {}]
  %s7 = inlined_call_operand.vmem [shape: bf16[400,784], index: 7, kind: input, shape index: {}]
  %s8 = inlined_call_operand.vmem [shape: f32[1,784], index: 8, kind: input, shape index: {}]
  %s9 = inlined_call_operand.vmem [shape: f32[8,20], index: 9, kind: input, shape index: {}]
  %s10 = inlined_call_operand.vmem [shape: f32[8,784], index: 10, kind: output, shape index: {0}]
  %s11 = inlined_call_operand.vmem [shape: f32[8,60], index: 11, kind: output, shape index: {1}]
  %12 = xla_tuple %s10, %s11
  %s13 = sld [smem:[#allocation0]]
  $region58: #{vae_forward.1} parent=0
    _
  %s15 = ssub.s32 1, %s13
  %s16 = scalar_select 0, %s15, %s13
  // Predicated region
  $region2: #{vae_forward.1} parent=0 // pred_check
    _
  $region3: #{vae_forward.1} parent=0 // pred_check_branch
    %18 = sbr.rel (0) target = $region5
  $region4: #{vae_forward.1} parent=0 // pred_region
    _
  $region5: #{vae_forward.1} parent=0 // pred_fallthru
    _
  // Predicated region
  $region6: #{vae_forward.1} parent=0 // pred_check
    _
  $region7: #{vae_forward.1} parent=0 // pred_check_branch
    %20 = sbr.rel (0) target = $region9
  $region8: #{vae_forward.1} parent=0 // pred_region
    _
  $region9: #{vae_forward.1} parent=0 // pred_fallthru
    _
  // Predicated region
  $region10: #{vae_forward.1} parent=0 // pred_check
    _
  $region11: #{vae_forward.1} parent=0 // pred_check_branch
    %22 = sbr.rel (0) target = $region13
  $region12: #{vae_forward.1} parent=0 // pred_region
    _
  $region13: #{vae_forward.1} parent=0 // pred_fallthru
    _
  // Predicated region
  $region14: #{vae_forward.1} parent=0 // pred_check
    _
  $region15: #{vae_forward.1} parent=0 // pred_check_branch
    %24 = sbr.rel (0) target = $region17
  $region16: #{vae_forward.1} parent=0 // pred_region
    _
  $region17: #{vae_forward.1} parent=0 // pred_fallthru
    _
  // Predicated region
  $region18: #{vae_forward.1} parent=0 // pred_check
    _
  $region19: #{vae_forward.1} parent=0 // pred_check_branch
    %26 = sbr.rel (0) target = $region21
  $region20: #{vae_forward.1} parent=0 // pred_region
    _
  $region21: #{vae_forward.1} parent=0 // pred_fallthru
    _
  // Predicated region
  $region22: #{vae_forward.1} parent=0 // pred_check
    _
  $region23: #{vae_forward.1} parent=0 // pred_check_branch
    %28 = sbr.rel (0) target = $region25
  $region24: #{vae_forward.1} parent=0 // pred_region
    _
  $region25: #{vae_forward.1} parent=0 // pred_fallthru
    _
  // Predicated region
  $region26: #{vae_forward.1} parent=0 // pred_check
    _
  $region27: #{vae_forward.1} parent=0 // pred_check_branch
    %30 = sbr.rel (0) target = $region29
  $region28: #{vae_forward.1} parent=0 // pred_region
    _
  $region29: #{vae_forward.1} parent=0 // pred_fallthru
    _
  // Predicated region
  $region30: #{vae_forward.1} parent=0 // pred_check
    _
  $region31: #{vae_forward.1} parent=0 // pred_check_branch
    %32 = sbr.rel (0) target = $region33
  $region32: #{vae_forward.1} parent=0 // pred_region
    _
  $region33: #{vae_forward.1} parent=0 // pred_fallthru
    _
  // Predicated region
  $region34: #{vae_forward.1} parent=0 // pred_check
    _
  $region35: #{vae_forward.1} parent=0 // pred_check_branch
    %34 = sbr.rel (0) target = $region37
  $region36: #{vae_forward.1} parent=0 // pred_region
    _
  $region37: #{vae_forward.1} parent=0 // pred_fallthru
    _
  // Predicated region
  $region38: #{vae_forward.1} parent=0 // pred_check
    _
  $region39: #{vae_forward.1} parent=0 // pred_check_branch
    %36 = sbr.rel (0) target = $region41
  $region40: #{vae_forward.1} parent=0 // pred_region
    _
  $region41: #{vae_forward.1} parent=0 // pred_fallthru
    _
  %v38 = vld [vmem:[%s0] sm:$0xff]
  %v39 = vld [vmem:[%s0 + $0x8] sm:$0xff]
  %v40 = vld [vmem:[%s0 + $0x10] sm:$0xff]
  %v41 = vld [vmem:[%s0 + $0x18] sm:$0xf]
  %v42 = vld [vmem:[%s1] sm:$0xff]
  %v43 = vld [vmem:[%s1 + $0x8] sm:$0xff]
  %v44 = vld [vmem:[%s1 + $0x10] sm:$0xff]
  %v45 = vld [vmem:[%s1 + $0x18] sm:$0xff]
  %v46 = vld [vmem:[%s1 + $0x20] sm:$0xff]
  %v47 = vld [vmem:[%s1 + $0x28] sm:$0xff]
  %v48 = vld [vmem:[%s1 + $0x30] sm:$0xff]
  %v49 = vld [vmem:[%s1 + $0x38] sm:$0xff]
  %v50 = vld [vmem:[%s1 + $0x40] sm:$0xff]
  %v51 = vld [vmem:[%s1 + $0x48] sm:$0xff]
  %v52 = vld [vmem:[%s1 + $0x50] sm:$0xff]
  %v53 = vld [vmem:[%s1 + $0x58] sm:$0xff]
  %v54 = vld [vmem:[%s1 + $0x60] sm:$0xff]
  %v55 = vld [vmem:[%s1 + $0x68] sm:$0xff]
  %v56 = vld [vmem:[%s1 + $0x70] sm:$0xff]
  %v57 = vld [vmem:[%s1 + $0x78] sm:$0xff]
  %v58 = vld [vmem:[%s1 + $0x80] sm:$0xff]
  %v59 = vld [vmem:[%s1 + $0x88] sm:$0xff]
  %v60 = vld [vmem:[%s1 + $0x90] sm:$0xff]
  %v61 = vld [vmem:[%s1 + $0x98] sm:$0xff]
  %v62 = vld [vmem:[%s1 + $0xa0] sm:$0xff]
  %v63 = vld [vmem:[%s1 + $0xa8] sm:$0xff]
  %v64 = vld [vmem:[%s1 + $0xb0] sm:$0xff]
  %v65 = vld [vmem:[%s1 + $0xb8] sm:$0xff]
  %v66 = vld [vmem:[%s1 + $0xc0] sm:$0xff]
  %v67 = vld [vmem:[%s1 + $0xc8] sm:$0xff]
  %v68 = vld [vmem:[%s1 + $0xd0] sm:$0xff]
  %v69 = vld [vmem:[%s1 + $0xd8] sm:$0xff]
  %v70 = vld [vmem:[%s1 + $0xe0] sm:$0xff]
  %v71 = vld [vmem:[%s1 + $0xe8] sm:$0xff]
  %v72 = vld [vmem:[%s1 + $0xf0] sm:$0xff]
  %v73 = vld [vmem:[%s1 + $0xf8] sm:$0xff]
  %v74 = vld [vmem:[%s1 + $0x100] sm:$0xff]
  %v75 = vld [vmem:[%s1 + $0x108] sm:$0xff]
  %v76 = vld [vmem:[%s1 + $0x110] sm:$0xff]
  %v77 = vld [vmem:[%s1 + $0x118] sm:$0xff]
  %v78 = vld [vmem:[%s1 + $0x120] sm:$0xff]
  %v79 = vld [vmem:[%s1 + $0x128] sm:$0xff]
  %v80 = vld [vmem:[%s1 + $0x130] sm:$0xff]
  %v81 = vld [vmem:[%s1 + $0x138] sm:$0xff]
  %v82 = vld [vmem:[%s1 + $0x140] sm:$0xff]
  %v83 = vld [vmem:[%s1 + $0x148] sm:$0xff]
  %v84 = vld [vmem:[%s1 + $0x150] sm:$0xff]
  %v85 = vld [vmem:[%s1 + $0x158] sm:$0xff]
  %v86 = vld [vmem:[%s1 + $0x160] sm:$0xff]
  %v87 = vld [vmem:[%s1 + $0x168] sm:$0xff]
  %v88 = vld [vmem:[%s1 + $0x170] sm:$0xff]
  %v89 = vld [vmem:[%s1 + $0x178] sm:$0xff]
  %v90 = vld [vmem:[%s1 + $0x180] sm:$0xff]
  %v91 = vld [vmem:[%s1 + $0x188] sm:$0xff]
  %v92 = vld [vmem:[%s1 + $0x190] sm:$0xff]
  %v93 = vld [vmem:[%s1 + $0x198] sm:$0xff]
  %v94 = vld [vmem:[%s1 + $0x1a0] sm:$0xff]
  %v95 = vld [vmem:[%s1 + $0x1a8] sm:$0xff]
  %v96 = vld [vmem:[%s1 + $0x1b0] sm:$0xff]
  %v97 = vld [vmem:[%s1 + $0x1b8] sm:$0xff]
  %v98 = vld [vmem:[%s1 + $0x1c0] sm:$0xff]
  %v99 = vld [vmem:[%s1 + $0x1c8] sm:$0xff]
  %v100 = vld [vmem:[%s1 + $0x1d0] sm:$0xff]
  %v101 = vld [vmem:[%s1 + $0x1d8] sm:$0xff]
  %v102 = vld [vmem:[%s1 + $0x1e0] sm:$0xff]
  %v103 = vld [vmem:[%s1 + $0x1e8] sm:$0xff]
  %v104 = vld [vmem:[%s1 + $0x1f0] sm:$0xff]
  %v105 = vld [vmem:[%s1 + $0x1f8] sm:$0xff]
  %v106 = vld [vmem:[%s1 + $0x200] sm:$0xff]
  %v107 = vld [vmem:[%s1 + $0x208] sm:$0xff]
  %v108 = vld [vmem:[%s1 + $0x210] sm:$0xff]
  %v109 = vld [vmem:[%s1 + $0x218] sm:$0xff]
  %v110 = vld [vmem:[%s1 + $0x220] sm:$0xff]
  %v111 = vld [vmem:[%s1 + $0x228] sm:$0xff]
  %v112 = vld [vmem:[%s1 + $0x230] sm:$0xff]
  %v113 = vld [vmem:[%s1 + $0x238] sm:$0xff]
  %v114 = vld [vmem:[%s1 + $0x240] sm:$0xff]
  %v115 = vld [vmem:[%s1 + $0x248] sm:$0xff]
  %v116 = vld [vmem:[%s1 + $0x250] sm:$0xff]
  %v117 = vld [vmem:[%s1 + $0x258] sm:$0xff]
  %v118 = vld [vmem:[%s1 + $0x260] sm:$0xff]
  %v119 = vld [vmem:[%s1 + $0x268] sm:$0xff]
  %v120 = vld [vmem:[%s1 + $0x270] sm:$0xff]
  %v121 = vld [vmem:[%s1 + $0x278] sm:$0xff]
  %v122 = vld [vmem:[%s1 + $0x280] sm:$0xff]
  %v123 = vld [vmem:[%s1 + $0x288] sm:$0xff]
  %v124 = vld [vmem:[%s1 + $0x290] sm:$0xff]
  %v125 = vld [vmem:[%s1 + $0x298] sm:$0xff]
  %v126 = vld [vmem:[%s1 + $0x2a0] sm:$0xff]
  %v127 = vld [vmem:[%s1 + $0x2a8] sm:$0xff]
  %v128 = vld [vmem:[%s1 + $0x2b0] sm:$0xff]
  %v129 = vld [vmem:[%s1 + $0x2b8] sm:$0xff]
  %v130 = vld [vmem:[%s1 + $0x2c0] sm:$0xff]
  %v131 = vld [vmem:[%s1 + $0x2c8] sm:$0xff]
  %v132 = vld [vmem:[%s1 + $0x2d0] sm:$0xff]
  %v133 = vld [vmem:[%s1 + $0x2d8] sm:$0xff]
  %v134 = vld [vmem:[%s1 + $0x2e0] sm:$0xff]
  %v135 = vld [vmem:[%s1 + $0x2e8] sm:$0xff]
  %v136 = vld [vmem:[%s1 + $0x2f0] sm:$0xff]
  %v137 = vld [vmem:[%s1 + $0x2f8] sm:$0xff]
  %v138 = vld [vmem:[%s1 + $0x300] sm:$0xff]
  %v139 = vld [vmem:[%s1 + $0x308] sm:$0xff]
  %v140 = vld [vmem:[%s1 + $0x310] sm:$0xff]
  %v141 = vld [vmem:[%s1 + $0x318] sm:$0xff]
  %v142 = vld [vmem:[%s1 + $0x320] sm:$0xff]
  %v143 = vld [vmem:[%s1 + $0x328] sm:$0xff]
  %v144 = vld [vmem:[%s1 + $0x330] sm:$0xff]
  %v145 = vld [vmem:[%s1 + $0x338] sm:$0xff]
  %v146 = vld [vmem:[%s1 + $0x340] sm:$0xff]
  %v147 = vld [vmem:[%s1 + $0x348] sm:$0xff]
  %v148 = vld [vmem:[%s1 + $0x350] sm:$0xff]
  %v149 = vld [vmem:[%s1 + $0x358] sm:$0xff]
  %v150 = vld [vmem:[%s1 + $0x360] sm:$0xff]
  %v151 = vld [vmem:[%s1 + $0x368] sm:$0xff]
  %v152 = vld [vmem:[%s1 + $0x370] sm:$0xff]
  %v153 = vld [vmem:[%s1 + $0x378] sm:$0xff]
  %v154 = vld [vmem:[%s1 + $0x380] sm:$0xff]
  %v155 = vld [vmem:[%s1 + $0x388] sm:$0xff]
  %v156 = vld [vmem:[%s1 + $0x390] sm:$0xff]
  %v157 = vld [vmem:[%s1 + $0x398] sm:$0xff]
  %v158 = vld [vmem:[%s1 + $0x3a0] sm:$0xff]
  %v159 = vld [vmem:[%s1 + $0x3a8] sm:$0xff]
  %v160 = vld [vmem:[%s1 + $0x3b0] sm:$0xff]
  %v161 = vld [vmem:[%s1 + $0x3b8] sm:$0xff]
  %v162 = vld [vmem:[%s1 + $0x3c0] sm:$0xff]
  %v163 = vld [vmem:[%s1 + $0x3c8] sm:$0xff]
  %v164 = vld [vmem:[%s1 + $0x3d0] sm:$0xff]
  %v165 = vld [vmem:[%s1 + $0x3d8] sm:$0xff]
  %v166 = vld [vmem:[%s1 + $0x3e0] sm:$0xff]
  %v167 = vld [vmem:[%s1 + $0x3e8] sm:$0xff]
  %v168 = vld [vmem:[%s1 + $0x3f0] sm:$0xff]
  %v169 = vld [vmem:[%s1 + $0x3f8] sm:$0xff]
  %v170 = vld [vmem:[%s1 + $0x400] sm:$0xff]
  %v171 = vld [vmem:[%s1 + $0x408] sm:$0xff]
  %v172 = vld [vmem:[%s1 + $0x410] sm:$0xff]
  %v173 = vld [vmem:[%s1 + $0x418] sm:$0xff]
  %v174 = vld [vmem:[%s1 + $0x420] sm:$0xff]
  %v175 = vld [vmem:[%s1 + $0x428] sm:$0xff]
  %v176 = vld [vmem:[%s1 + $0x430] sm:$0xff]
  %v177 = vld [vmem:[%s1 + $0x438] sm:$0xff]
  %v178 = vld [vmem:[%s1 + $0x440] sm:$0xff]
  %v179 = vld [vmem:[%s1 + $0x448] sm:$0xff]
  %v180 = vld [vmem:[%s1 + $0x450] sm:$0xff]
  %v181 = vld [vmem:[%s1 + $0x458] sm:$0xff]
  %v182 = vld [vmem:[%s1 + $0x460] sm:$0xff]
  %v183 = vld [vmem:[%s1 + $0x468] sm:$0xff]
  %v184 = vld [vmem:[%s1 + $0x470] sm:$0xff]
  %v185 = vld [vmem:[%s1 + $0x478] sm:$0xff]
  %v186 = vld [vmem:[%s1 + $0x480] sm:$0xff]
  %v187 = vld [vmem:[%s1 + $0x488] sm:$0xff]
  %v188 = vld [vmem:[%s1 + $0x490] sm:$0xff]
  %v189 = vld [vmem:[%s1 + $0x498] sm:$0xff]
  %v190 = vld [vmem:[%s1 + $0x4a0] sm:$0xff]
  %v191 = vld [vmem:[%s1 + $0x4a8] sm:$0xff]
  %v192 = vld [vmem:[%s1 + $0x4b0] sm:$0xff]
  %v193 = vld [vmem:[%s1 + $0x4b8] sm:$0xff]
  %v194 = vld [vmem:[%s1 + $0x4c0] sm:$0xff]
  %v195 = vld [vmem:[%s1 + $0x4c8] sm:$0xff]
  %v196 = vld [vmem:[%s1 + $0x4d0] sm:$0xff]
  %v197 = vld [vmem:[%s1 + $0x4d8] sm:$0xff]
  %v198 = vld [vmem:[%s1 + $0x4e0] sm:$0xff]
  %v199 = vld [vmem:[%s1 + $0x4e8] sm:$0xff]
  %v200 = vld [vmem:[%s1 + $0x4f0] sm:$0xff]
  %v201 = vld [vmem:[%s1 + $0x4f8] sm:$0xff]
  %v202 = vld [vmem:[%s1 + $0x500] sm:$0xff]
  %v203 = vld [vmem:[%s1 + $0x508] sm:$0xff]
  %v204 = vld [vmem:[%s1 + $0x510] sm:$0xff]
  %v205 = vld [vmem:[%s1 + $0x518] sm:$0xff]
  %v206 = vld [vmem:[%s1 + $0x520] sm:$0xff]
  %v207 = vld [vmem:[%s1 + $0x528] sm:$0xff]
  %v208 = vld [vmem:[%s1 + $0x530] sm:$0xff]
  %v209 = vld [vmem:[%s1 + $0x538] sm:$0xff]
  %v210 = vld [vmem:[%s1 + $0x540] sm:$0xff]
  %v211 = vld [vmem:[%s1 + $0x548] sm:$0xff]
  %v212 = vld [vmem:[%s1 + $0x550] sm:$0xff]
  %v213 = vld [vmem:[%s1 + $0x558] sm:$0xff]
  %v214 = vld [vmem:[%s1 + $0x560] sm:$0xff]
  %v215 = vld [vmem:[%s1 + $0x568] sm:$0xff]
  %v216 = vld [vmem:[%s1 + $0x570] sm:$0xff]
  %v217 = vld [vmem:[%s1 + $0x578] sm:$0xff]
  %v218 = vld [vmem:[%s1 + $0x580] sm:$0xff]
  %v219 = vld [vmem:[%s1 + $0x588] sm:$0xff]
  %v220 = vld [vmem:[%s1 + $0x590] sm:$0xff]
  %v221 = vld [vmem:[%s1 + $0x598] sm:$0xff]
  %v222 = vld [vmem:[%s1 + $0x5a0] sm:$0xff]
  %v223 = vld [vmem:[%s1 + $0x5a8] sm:$0xff]
  %v224 = vld [vmem:[%s1 + $0x5b0] sm:$0xff]
  %v225 = vld [vmem:[%s1 + $0x5b8] sm:$0xff]
  %v226 = vld [vmem:[%s1 + $0x5c0] sm:$0xff]
  %v227 = vld [vmem:[%s1 + $0x5c8] sm:$0xff]
  %v228 = vld [vmem:[%s1 + $0x5d0] sm:$0xff]
  %v229 = vld [vmem:[%s1 + $0x5d8] sm:$0xff]
  %v230 = vld [vmem:[%s1 + $0x5e0] sm:$0xff]
  %v231 = vld [vmem:[%s1 + $0x5e8] sm:$0xff]
  %v232 = vld [vmem:[%s1 + $0x5f0] sm:$0xff]
  %v233 = vld [vmem:[%s1 + $0x5f8] sm:$0xff]
  %v234 = vld [vmem:[%s1 + $0x600] sm:$0xff]
  %v235 = vld [vmem:[%s1 + $0x608] sm:$0xff]
  %v236 = vld [vmem:[%s1 + $0x610] sm:$0xff]
  %v237 = vld [vmem:[%s1 + $0x618] sm:$0xff]
  %v238 = vld [vmem:[%s2] sm:$0xf]
  %v240 = vlaneseq
  %v241 = vshrl.u32 %v240, 7
  %v242 = vsub.s32 0, %v241
  %v243 = vrot.slane %v238, %v242
  %v244 = vlaneseq
  %v245 = vshrl.u32 %v244, 7
  %v246 = vsub.s32 1, %v245
  %v247 = vrot.slane %v238, %v246
  %v248 = vlaneseq
  %v249 = vshrl.u32 %v248, 7
  %v250 = vsub.s32 2, %v249
  %v251 = vrot.slane %v238, %v250
  %v252 = vlaneseq
  %v253 = vshrl.u32 %v252, 7
  %v254 = vsub.s32 3, %v253
  %v255 = vrot.slane %v238, %v254
  %v264 = vunpack.c.l.b16 %v38
  %v265 = vunpack.c.h.b16 %v38
  %v266 = vunpack.c.l.b16 %v39
  %v267 = vunpack.c.h.b16 %v39
  %v268 = vunpack.c.l.b16 %v40
  %v269 = vunpack.c.h.b16 %v40
  %v270 = vunpack.c.l.b16 %v41
  %v271 = vpack.c.b16 %v264, %v264
  %v272 = vpack.c.b16 %v265, %v265
  %v273 = vpack.c.b16 %v266, %v266
  %v274 = vpack.c.b16 %v267, %v267
  %v275 = vpack.c.b16 %v268, %v268
  %v276 = vpack.c.b16 %v269, %v269
  %v277 = vpack.c.b16 %v270, %v270
  %v480 = vunpack.c.l.b16 %v42
  %v481 = vunpack.c.h.b16 %v42
  %v482 = vunpack.c.l.b16 %v43
  %v483 = vunpack.c.h.b16 %v43
  %v484 = vunpack.c.l.b16 %v44
  %v485 = vunpack.c.h.b16 %v44
  %v486 = vunpack.c.l.b16 %v45
  %v487 = vunpack.c.h.b16 %v45
  %v488 = vunpack.c.l.b16 %v46
  %v489 = vunpack.c.h.b16 %v46
  %v490 = vunpack.c.l.b16 %v47
  %v491 = vunpack.c.h.b16 %v47
  %v492 = vunpack.c.l.b16 %v48
  %v493 = vunpack.c.h.b16 %v48
  %v494 = vunpack.c.l.b16 %v49
  %v495 = vunpack.c.h.b16 %v49
  %v496 = vunpack.c.l.b16 %v50
  %v497 = vunpack.c.h.b16 %v50
  %v498 = vunpack.c.l.b16 %v51
  %v499 = vunpack.c.h.b16 %v51
  %v500 = vunpack.c.l.b16 %v52
  %v501 = vunpack.c.h.b16 %v52
  %v502 = vunpack.c.l.b16 %v53
  %v503 = vunpack.c.h.b16 %v53
  %v504 = vunpack.c.l.b16 %v54
  %v505 = vunpack.c.h.b16 %v54
  %v506 = vunpack.c.l.b16 %v55
  %v507 = vunpack.c.h.b16 %v55
  %v508 = vunpack.c.l.b16 %v56
  %v509 = vunpack.c.h.b16 %v56
  %v510 = vunpack.c.l.b16 %v57
  %v511 = vunpack.c.h.b16 %v57
  %v512 = vunpack.c.l.b16 %v58
  %v513 = vunpack.c.h.b16 %v58
  %v514 = vunpack.c.l.b16 %v59
  %v515 = vunpack.c.h.b16 %v59
  %v516 = vunpack.c.l.b16 %v60
  %v517 = vunpack.c.h.b16 %v60
  %v518 = vunpack.c.l.b16 %v61
  %v519 = vunpack.c.h.b16 %v61
  %v520 = vunpack.c.l.b16 %v62
  %v521 = vunpack.c.h.b16 %v62
  %v522 = vunpack.c.l.b16 %v63
  %v523 = vunpack.c.h.b16 %v63
  %v524 = vunpack.c.l.b16 %v64
  %v525 = vunpack.c.h.b16 %v64
  %v526 = vunpack.c.l.b16 %v65
  %v527 = vunpack.c.h.b16 %v65
  %v528 = vunpack.c.l.b16 %v66
  %v529 = vunpack.c.h.b16 %v66
  %v530 = vunpack.c.l.b16 %v67
  %v531 = vunpack.c.h.b16 %v67
  %v532 = vunpack.c.l.b16 %v68
  %v533 = vunpack.c.h.b16 %v68
  %v534 = vunpack.c.l.b16 %v69
  %v535 = vunpack.c.h.b16 %v69
  %v536 = vunpack.c.l.b16 %v70
  %v537 = vunpack.c.h.b16 %v70
  %v538 = vunpack.c.l.b16 %v71
  %v539 = vunpack.c.h.b16 %v71
  %v540 = vunpack.c.l.b16 %v72
  %v541 = vunpack.c.h.b16 %v72
  %v542 = vunpack.c.l.b16 %v73
  %v543 = vunpack.c.h.b16 %v73
  %v544 = vunpack.c.l.b16 %v74
  %v545 = vunpack.c.h.b16 %v74
  %v546 = vunpack.c.l.b16 %v75
  %v547 = vunpack.c.h.b16 %v75
  %v548 = vunpack.c.l.b16 %v76
  %v549 = vunpack.c.h.b16 %v76
  %v550 = vunpack.c.l.b16 %v77
  %v551 = vunpack.c.h.b16 %v77
  %v552 = vunpack.c.l.b16 %v78
  %v553 = vunpack.c.h.b16 %v78
  %v554 = vunpack.c.l.b16 %v79
  %v555 = vunpack.c.h.b16 %v79
  %v556 = vunpack.c.l.b16 %v80
  %v557 = vunpack.c.h.b16 %v80
  %v558 = vunpack.c.l.b16 %v81
  %v559 = vunpack.c.h.b16 %v81
  %v560 = vunpack.c.l.b16 %v82
  %v561 = vunpack.c.h.b16 %v82
  %v562 = vunpack.c.l.b16 %v83
  %v563 = vunpack.c.h.b16 %v83
  %v564 = vunpack.c.l.b16 %v84
  %v565 = vunpack.c.h.b16 %v84
  %v566 = vunpack.c.l.b16 %v85
  %v567 = vunpack.c.h.b16 %v85
  %v568 = vunpack.c.l.b16 %v86
  %v569 = vunpack.c.h.b16 %v86
  %v570 = vunpack.c.l.b16 %v87
  %v571 = vunpack.c.h.b16 %v87
  %v572 = vunpack.c.l.b16 %v88
  %v573 = vunpack.c.h.b16 %v88
  %v574 = vunpack.c.l.b16 %v89
  %v575 = vunpack.c.h.b16 %v89
  %v576 = vunpack.c.l.b16 %v90
  %v577 = vunpack.c.h.b16 %v90
  %v578 = vunpack.c.l.b16 %v91
  %v579 = vunpack.c.h.b16 %v91
  %v580 = vunpack.c.l.b16 %v92
  %v581 = vunpack.c.h.b16 %v92
  %v582 = vunpack.c.l.b16 %v93
  %v583 = vunpack.c.h.b16 %v93
  %v584 = vunpack.c.l.b16 %v94
  %v585 = vunpack.c.h.b16 %v94
  %v586 = vunpack.c.l.b16 %v95
  %v587 = vunpack.c.h.b16 %v95
  %v588 = vunpack.c.l.b16 %v96
  %v589 = vunpack.c.h.b16 %v96
  %v590 = vunpack.c.l.b16 %v97
  %v591 = vunpack.c.h.b16 %v97
  %v592 = vunpack.c.l.b16 %v98
  %v593 = vunpack.c.h.b16 %v98
  %v594 = vunpack.c.l.b16 %v99
  %v595 = vunpack.c.h.b16 %v99
  %v596 = vunpack.c.l.b16 %v100
  %v597 = vunpack.c.h.b16 %v100
  %v598 = vunpack.c.l.b16 %v101
  %v599 = vunpack.c.h.b16 %v101
  %v600 = vunpack.c.l.b16 %v102
  %v601 = vunpack.c.h.b16 %v102
  %v602 = vunpack.c.l.b16 %v103
  %v603 = vunpack.c.h.b16 %v103
  %v604 = vunpack.c.l.b16 %v104
  %v605 = vunpack.c.h.b16 %v104
  %v606 = vunpack.c.l.b16 %v105
  %v607 = vunpack.c.h.b16 %v105
  %v608 = vunpack.c.l.b16 %v106
  %v609 = vunpack.c.h.b16 %v106
  %v610 = vunpack.c.l.b16 %v107
  %v611 = vunpack.c.h.b16 %v107
  %v612 = vunpack.c.l.b16 %v108
  %v613 = vunpack.c.h.b16 %v108
  %v614 = vunpack.c.l.b16 %v109
  %v615 = vunpack.c.h.b16 %v109
  %v616 = vunpack.c.l.b16 %v110
  %v617 = vunpack.c.h.b16 %v110
  %v618 = vunpack.c.l.b16 %v111
  %v619 = vunpack.c.h.b16 %v111
  %v620 = vunpack.c.l.b16 %v112
  %v621 = vunpack.c.h.b16 %v112
  %v622 = vunpack.c.l.b16 %v113
  %v623 = vunpack.c.h.b16 %v113
  %v624 = vunpack.c.l.b16 %v114
  %v625 = vunpack.c.h.b16 %v114
  %v626 = vunpack.c.l.b16 %v115
  %v627 = vunpack.c.h.b16 %v115
  %v628 = vunpack.c.l.b16 %v116
  %v629 = vunpack.c.h.b16 %v116
  %v630 = vunpack.c.l.b16 %v117
  %v631 = vunpack.c.h.b16 %v117
  %v632 = vunpack.c.l.b16 %v118
  %v633 = vunpack.c.h.b16 %v118
  %v634 = vunpack.c.l.b16 %v119
  %v635 = vunpack.c.h.b16 %v119
  %v636 = vunpack.c.l.b16 %v120
  %v637 = vunpack.c.h.b16 %v120
  %v638 = vunpack.c.l.b16 %v121
  %v639 = vunpack.c.h.b16 %v121
  %v640 = vunpack.c.l.b16 %v122
  %v641 = vunpack.c.h.b16 %v122
  %v642 = vunpack.c.l.b16 %v123
  %v643 = vunpack.c.h.b16 %v123
  %v644 = vunpack.c.l.b16 %v124
  %v645 = vunpack.c.h.b16 %v124
  %v646 = vunpack.c.l.b16 %v125
  %v647 = vunpack.c.h.b16 %v125
  %v648 = vunpack.c.l.b16 %v126
  %v649 = vunpack.c.h.b16 %v126
  %v650 = vunpack.c.l.b16 %v127
  %v651 = vunpack.c.h.b16 %v127
  %v652 = vunpack.c.l.b16 %v128
  %v653 = vunpack.c.h.b16 %v128
  %v654 = vunpack.c.l.b16 %v129
  %v655 = vunpack.c.h.b16 %v129
  %v656 = vunpack.c.l.b16 %v130
  %v657 = vunpack.c.h.b16 %v130
  %v658 = vunpack.c.l.b16 %v131
  %v659 = vunpack.c.h.b16 %v131
  %v660 = vunpack.c.l.b16 %v132
  %v661 = vunpack.c.h.b16 %v132
  %v662 = vunpack.c.l.b16 %v133
  %v663 = vunpack.c.h.b16 %v133
  %v664 = vunpack.c.l.b16 %v134
  %v665 = vunpack.c.h.b16 %v134
  %v666 = vunpack.c.l.b16 %v135
  %v667 = vunpack.c.h.b16 %v135
  %v668 = vunpack.c.l.b16 %v136
  %v669 = vunpack.c.h.b16 %v136
  %v670 = vunpack.c.l.b16 %v137
  %v671 = vunpack.c.h.b16 %v137
  %v672 = vunpack.c.l.b16 %v138
  %v673 = vunpack.c.h.b16 %v138
  %v674 = vunpack.c.l.b16 %v139
  %v675 = vunpack.c.h.b16 %v139
  %v676 = vunpack.c.l.b16 %v140
  %v677 = vunpack.c.h.b16 %v140
  %v678 = vunpack.c.l.b16 %v141
  %v679 = vunpack.c.h.b16 %v141
  %v680 = vunpack.c.l.b16 %v142
  %v681 = vunpack.c.h.b16 %v142
  %v682 = vunpack.c.l.b16 %v143
  %v683 = vunpack.c.h.b16 %v143
  %v684 = vunpack.c.l.b16 %v144
  %v685 = vunpack.c.h.b16 %v144
  %v686 = vunpack.c.l.b16 %v145
  %v687 = vunpack.c.h.b16 %v145
  %v688 = vunpack.c.l.b16 %v146
  %v689 = vunpack.c.h.b16 %v146
  %v690 = vunpack.c.l.b16 %v147
  %v691 = vunpack.c.h.b16 %v147
  %v692 = vunpack.c.l.b16 %v148
  %v693 = vunpack.c.h.b16 %v148
  %v694 = vunpack.c.l.b16 %v149
  %v695 = vunpack.c.h.b16 %v149
  %v696 = vunpack.c.l.b16 %v150
  %v697 = vunpack.c.h.b16 %v150
  %v698 = vunpack.c.l.b16 %v151
  %v699 = vunpack.c.h.b16 %v151
  %v700 = vunpack.c.l.b16 %v152
  %v701 = vunpack.c.h.b16 %v152
  %v702 = vunpack.c.l.b16 %v153
  %v703 = vunpack.c.h.b16 %v153
  %v704 = vunpack.c.l.b16 %v154
  %v705 = vunpack.c.h.b16 %v154
  %v706 = vunpack.c.l.b16 %v155
  %v707 = vunpack.c.h.b16 %v155
  %v708 = vunpack.c.l.b16 %v156
  %v709 = vunpack.c.h.b16 %v156
  %v710 = vunpack.c.l.b16 %v157
  %v711 = vunpack.c.h.b16 %v157
  %v712 = vunpack.c.l.b16 %v158
  %v713 = vunpack.c.h.b16 %v158
  %v714 = vunpack.c.l.b16 %v159
  %v715 = vunpack.c.h.b16 %v159
  %v716 = vunpack.c.l.b16 %v160
  %v717 = vunpack.c.h.b16 %v160
  %v718 = vunpack.c.l.b16 %v161
  %v719 = vunpack.c.h.b16 %v161
  %v720 = vunpack.c.l.b16 %v162
  %v721 = vunpack.c.h.b16 %v162
  %v722 = vunpack.c.l.b16 %v163
  %v723 = vunpack.c.h.b16 %v163
  %v724 = vunpack.c.l.b16 %v164
  %v725 = vunpack.c.h.b16 %v164
  %v726 = vunpack.c.l.b16 %v165
  %v727 = vunpack.c.h.b16 %v165
  %v728 = vunpack.c.l.b16 %v166
  %v729 = vunpack.c.h.b16 %v166
  %v730 = vunpack.c.l.b16 %v167
  %v731 = vunpack.c.h.b16 %v167
  %v732 = vunpack.c.l.b16 %v168
  %v733 = vunpack.c.h.b16 %v168
  %v734 = vunpack.c.l.b16 %v169
  %v735 = vunpack.c.h.b16 %v169
  %v736 = vunpack.c.l.b16 %v170
  %v737 = vunpack.c.h.b16 %v170
  %v738 = vunpack.c.l.b16 %v171
  %v739 = vunpack.c.h.b16 %v171
  %v740 = vunpack.c.l.b16 %v172
  %v741 = vunpack.c.h.b16 %v172
  %v742 = vunpack.c.l.b16 %v173
  %v743 = vunpack.c.h.b16 %v173
  %v744 = vunpack.c.l.b16 %v174
  %v745 = vunpack.c.h.b16 %v174
  %v746 = vunpack.c.l.b16 %v175
  %v747 = vunpack.c.h.b16 %v175
  %v748 = vunpack.c.l.b16 %v176
  %v749 = vunpack.c.h.b16 %v176
  %v750 = vunpack.c.l.b16 %v177
  %v751 = vunpack.c.h.b16 %v177
  %v752 = vunpack.c.l.b16 %v178
  %v753 = vunpack.c.h.b16 %v178
  %v754 = vunpack.c.l.b16 %v179
  %v755 = vunpack.c.h.b16 %v179
  %v756 = vunpack.c.l.b16 %v180
  %v757 = vunpack.c.h.b16 %v180
  %v758 = vunpack.c.l.b16 %v181
  %v759 = vunpack.c.h.b16 %v181
  %v760 = vunpack.c.l.b16 %v182
  %v761 = vunpack.c.h.b16 %v182
  %v762 = vunpack.c.l.b16 %v183
  %v763 = vunpack.c.h.b16 %v183
  %v764 = vunpack.c.l.b16 %v184
  %v765 = vunpack.c.h.b16 %v184
  %v766 = vunpack.c.l.b16 %v185
  %v767 = vunpack.c.h.b16 %v185
  %v768 = vunpack.c.l.b16 %v186
  %v769 = vunpack.c.h.b16 %v186
  %v770 = vunpack.c.l.b16 %v187
  %v771 = vunpack.c.h.b16 %v187
  %v772 = vunpack.c.l.b16 %v188
  %v773 = vunpack.c.h.b16 %v188
  %v774 = vunpack.c.l.b16 %v189
  %v775 = vunpack.c.h.b16 %v189
  %v776 = vunpack.c.l.b16 %v190
  %v777 = vunpack.c.h.b16 %v190
  %v778 = vunpack.c.l.b16 %v191
  %v779 = vunpack.c.h.b16 %v191
  %v780 = vunpack.c.l.b16 %v192
  %v781 = vunpack.c.h.b16 %v192
  %v782 = vunpack.c.l.b16 %v193
  %v783 = vunpack.c.h.b16 %v193
  %v784 = vunpack.c.l.b16 %v194
  %v785 = vunpack.c.h.b16 %v194
  %v786 = vunpack.c.l.b16 %v195
  %v787 = vunpack.c.h.b16 %v195
  %v788 = vunpack.c.l.b16 %v196
  %v789 = vunpack.c.h.b16 %v196
  %v790 = vunpack.c.l.b16 %v197
  %v791 = vunpack.c.h.b16 %v197
  %v792 = vunpack.c.l.b16 %v198
  %v793 = vunpack.c.h.b16 %v198
  %v794 = vunpack.c.l.b16 %v199
  %v795 = vunpack.c.h.b16 %v199
  %v796 = vunpack.c.l.b16 %v200
  %v797 = vunpack.c.h.b16 %v200
  %v798 = vunpack.c.l.b16 %v201
  %v799 = vunpack.c.h.b16 %v201
  %v800 = vunpack.c.l.b16 %v202
  %v801 = vunpack.c.h.b16 %v202
  %v802 = vunpack.c.l.b16 %v203
  %v803 = vunpack.c.h.b16 %v203
  %v804 = vunpack.c.l.b16 %v204
  %v805 = vunpack.c.h.b16 %v204
  %v806 = vunpack.c.l.b16 %v205
  %v807 = vunpack.c.h.b16 %v205
  %v808 = vunpack.c.l.b16 %v206
  %v809 = vunpack.c.h.b16 %v206
  %v810 = vunpack.c.l.b16 %v207
  %v811 = vunpack.c.h.b16 %v207
  %v812 = vunpack.c.l.b16 %v208
  %v813 = vunpack.c.h.b16 %v208
  %v814 = vunpack.c.l.b16 %v209
  %v815 = vunpack.c.h.b16 %v209
  %v816 = vunpack.c.l.b16 %v210
  %v817 = vunpack.c.h.b16 %v210
  %v818 = vunpack.c.l.b16 %v211
  %v819 = vunpack.c.h.b16 %v211
  %v820 = vunpack.c.l.b16 %v212
  %v821 = vunpack.c.h.b16 %v212
  %v822 = vunpack.c.l.b16 %v213
  %v823 = vunpack.c.h.b16 %v213
  %v824 = vunpack.c.l.b16 %v214
  %v825 = vunpack.c.h.b16 %v214
  %v826 = vunpack.c.l.b16 %v215
  %v827 = vunpack.c.h.b16 %v215
  %v828 = vunpack.c.l.b16 %v216
  %v829 = vunpack.c.h.b16 %v216
  %v830 = vunpack.c.l.b16 %v217
  %v831 = vunpack.c.h.b16 %v217
  %v832 = vunpack.c.l.b16 %v218
  %v833 = vunpack.c.h.b16 %v218
  %v834 = vunpack.c.l.b16 %v219
  %v835 = vunpack.c.h.b16 %v219
  %v836 = vunpack.c.l.b16 %v220
  %v837 = vunpack.c.h.b16 %v220
  %v838 = vunpack.c.l.b16 %v221
  %v839 = vunpack.c.h.b16 %v221
  %v840 = vunpack.c.l.b16 %v222
  %v841 = vunpack.c.h.b16 %v222
  %v842 = vunpack.c.l.b16 %v223
  %v843 = vunpack.c.h.b16 %v223
  %v844 = vunpack.c.l.b16 %v224
  %v845 = vunpack.c.h.b16 %v224
  %v846 = vunpack.c.l.b16 %v225
  %v847 = vunpack.c.h.b16 %v225
  %v848 = vunpack.c.l.b16 %v226
  %v849 = vunpack.c.h.b16 %v226
  %v850 = vunpack.c.l.b16 %v227
  %v851 = vunpack.c.h.b16 %v227
  %v852 = vunpack.c.l.b16 %v228
  %v853 = vunpack.c.h.b16 %v228
  %v854 = vunpack.c.l.b16 %v229
  %v855 = vunpack.c.h.b16 %v229
  %v856 = vunpack.c.l.b16 %v230
  %v857 = vunpack.c.h.b16 %v230
  %v858 = vunpack.c.l.b16 %v231
  %v859 = vunpack.c.h.b16 %v231
  %v860 = vunpack.c.l.b16 %v232
  %v861 = vunpack.c.h.b16 %v232
  %v862 = vunpack.c.l.b16 %v233
  %v863 = vunpack.c.h.b16 %v233
  %v864 = vunpack.c.l.b16 %v234
  %v865 = vunpack.c.h.b16 %v234
  %v866 = vunpack.c.l.b16 %v235
  %v867 = vunpack.c.h.b16 %v235
  %v868 = vunpack.c.l.b16 %v236
  %v869 = vunpack.c.h.b16 %v236
  %v870 = vunpack.c.l.b16 %v237
  %v871 = vunpack.c.h.b16 %v237
  %v872 = vpack.c.b16 %v484, %v480
  %v873 = vpack.c.b16 %v485, %v481
  %v874 = vpack.c.b16 %v486, %v482
  %v875 = vpack.c.b16 %v487, %v483
  %v876 = vpack.c.b16 %v492, %v488
  %v877 = vpack.c.b16 %v493, %v489
  %v878 = vpack.c.b16 %v494, %v490
  %v879 = vpack.c.b16 %v495, %v491
  %v880 = vpack.c.b16 %v500, %v496
  %v881 = vpack.c.b16 %v501, %v497
  %v882 = vpack.c.b16 %v502, %v498
  %v883 = vpack.c.b16 %v503, %v499
  %v884 = vpack.c.b16 %v508, %v504
  %v885 = vpack.c.b16 %v509, %v505
  %v886 = vpack.c.b16 %v510, %v506
  %v887 = vpack.c.b16 %v511, %v507
  %v888 = vpack.c.b16 %v516, %v512
  %v889 = vpack.c.b16 %v517, %v513
  %v890 = vpack.c.b16 %v518, %v514
  %v891 = vpack.c.b16 %v519, %v515
  %v892 = vpack.c.b16 %v524, %v520
  %v893 = vpack.c.b16 %v525, %v521
  %v894 = vpack.c.b16 %v526, %v522
  %v895 = vpack.c.b16 %v527, %v523
  %v896 = vpack.c.b16 %v532, %v528
  %v897 = vpack.c.b16 %v533, %v529
  %v898 = vpack.c.b16 %v534, %v530
  %v899 = vpack.c.b16 %v535, %v531
  %v900 = vpack.c.b16 %v540, %v536
  %v901 = vpack.c.b16 %v541, %v537
  %v902 = vpack.c.b16 %v542, %v538
  %v903 = vpack.c.b16 %v543, %v539
  %v904 = vpack.c.b16 %v548, %v544
  %v905 = vpack.c.b16 %v549, %v545
  %v906 = vpack.c.b16 %v550, %v546
  %v907 = vpack.c.b16 %v551, %v547
  %v908 = vpack.c.b16 %v556, %v552
  %v909 = vpack.c.b16 %v557, %v553
  %v910 = vpack.c.b16 %v558, %v554
  %v911 = vpack.c.b16 %v559, %v555
  %v912 = vpack.c.b16 %v564, %v560
  %v913 = vpack.c.b16 %v565, %v561
  %v914 = vpack.c.b16 %v566, %v562
  %v915 = vpack.c.b16 %v567, %v563
  %v916 = vpack.c.b16 %v572, %v568
  %v917 = vpack.c.b16 %v573, %v569
  %v918 = vpack.c.b16 %v574, %v570
  %v919 = vpack.c.b16 %v575, %v571
  %v920 = vpack.c.b16 %v580, %v576
  %v921 = vpack.c.b16 %v581, %v577
  %v922 = vpack.c.b16 %v582, %v578
  %v923 = vpack.c.b16 %v583, %v579
  %v924 = vpack.c.b16 %v588, %v584
  %v925 = vpack.c.b16 %v589, %v585
  %v926 = vpack.c.b16 %v590, %v586
  %v927 = vpack.c.b16 %v591, %v587
  %v928 = vpack.c.b16 %v596, %v592
  %v929 = vpack.c.b16 %v597, %v593
  %v930 = vpack.c.b16 %v598, %v594
  %v931 = vpack.c.b16 %v599, %v595
  %v932 = vpack.c.b16 %v604, %v600
  %v933 = vpack.c.b16 %v605, %v601
  %v934 = vpack.c.b16 %v606, %v602
  %v935 = vpack.c.b16 %v607, %v603
  %v936 = vpack.c.b16 %v612, %v608
  %v937 = vpack.c.b16 %v613, %v609
  %v938 = vpack.c.b16 %v614, %v610
  %v939 = vpack.c.b16 %v615, %v611
  %v940 = vpack.c.b16 %v620, %v616
  %v941 = vpack.c.b16 %v621, %v617
  %v942 = vpack.c.b16 %v622, %v618
  %v943 = vpack.c.b16 %v623, %v619
  %v944 = vpack.c.b16 %v628, %v624
  %v945 = vpack.c.b16 %v629, %v625
  %v946 = vpack.c.b16 %v630, %v626
  %v947 = vpack.c.b16 %v631, %v627
  %v948 = vpack.c.b16 %v636, %v632
  %v949 = vpack.c.b16 %v637, %v633
  %v950 = vpack.c.b16 %v638, %v634
  %v951 = vpack.c.b16 %v639, %v635
  %v952 = vpack.c.b16 %v644, %v640
  %v953 = vpack.c.b16 %v645, %v641
  %v954 = vpack.c.b16 %v646, %v642
  %v955 = vpack.c.b16 %v647, %v643
  %v956 = vpack.c.b16 %v652, %v648
  %v957 = vpack.c.b16 %v653, %v649
  %v958 = vpack.c.b16 %v654, %v650
  %v959 = vpack.c.b16 %v655, %v651
  %v960 = vpack.c.b16 %v660, %v656
  %v961 = vpack.c.b16 %v661, %v657
  %v962 = vpack.c.b16 %v662, %v658
  %v963 = vpack.c.b16 %v663, %v659
  %v964 = vpack.c.b16 %v668, %v664
  %v965 = vpack.c.b16 %v669, %v665
  %v966 = vpack.c.b16 %v670, %v666
  %v967 = vpack.c.b16 %v671, %v667
  %v968 = vpack.c.b16 %v676, %v672
  %v969 = vpack.c.b16 %v677, %v673
  %v970 = vpack.c.b16 %v678, %v674
  %v971 = vpack.c.b16 %v679, %v675
  %v972 = vpack.c.b16 %v684, %v680
  %v973 = vpack.c.b16 %v685, %v681
  %v974 = vpack.c.b16 %v686, %v682
  %v975 = vpack.c.b16 %v687, %v683
  %v976 = vpack.c.b16 %v692, %v688
  %v977 = vpack.c.b16 %v693, %v689
  %v978 = vpack.c.b16 %v694, %v690
  %v979 = vpack.c.b16 %v695, %v691
  %v980 = vpack.c.b16 %v700, %v696
  %v981 = vpack.c.b16 %v701, %v697
  %v982 = vpack.c.b16 %v702, %v698
  %v983 = vpack.c.b16 %v703, %v699
  %v984 = vpack.c.b16 %v708, %v704
  %v985 = vpack.c.b16 %v709, %v705
  %v986 = vpack.c.b16 %v710, %v706
  %v987 = vpack.c.b16 %v711, %v707
  %v988 = vpack.c.b16 %v716, %v712
  %v989 = vpack.c.b16 %v717, %v713
  %v990 = vpack.c.b16 %v718, %v714
  %v991 = vpack.c.b16 %v719, %v715
  %v992 = vpack.c.b16 %v724, %v720
  %v993 = vpack.c.b16 %v725, %v721
  %v994 = vpack.c.b16 %v726, %v722
  %v995 = vpack.c.b16 %v727, %v723
  %v996 = vpack.c.b16 %v732, %v728
  %v997 = vpack.c.b16 %v733, %v729
  %v998 = vpack.c.b16 %v734, %v730
  %v999 = vpack.c.b16 %v735, %v731
  %v1000 = vpack.c.b16 %v740, %v736
  %v1001 = vpack.c.b16 %v741, %v737
  %v1002 = vpack.c.b16 %v742, %v738
  %v1003 = vpack.c.b16 %v743, %v739
  %v1004 = vpack.c.b16 %v748, %v744
  %v1005 = vpack.c.b16 %v749, %v745
  %v1006 = vpack.c.b16 %v750, %v746
  %v1007 = vpack.c.b16 %v751, %v747
  %v1008 = vpack.c.b16 %v756, %v752
  %v1009 = vpack.c.b16 %v757, %v753
  %v1010 = vpack.c.b16 %v758, %v754
  %v1011 = vpack.c.b16 %v759, %v755
  %v1012 = vpack.c.b16 %v764, %v760
  %v1013 = vpack.c.b16 %v765, %v761
  %v1014 = vpack.c.b16 %v766, %v762
  %v1015 = vpack.c.b16 %v767, %v763
  %v1016 = vpack.c.b16 %v772, %v768
  %v1017 = vpack.c.b16 %v773, %v769
  %v1018 = vpack.c.b16 %v774, %v770
  %v1019 = vpack.c.b16 %v775, %v771
  %v1020 = vpack.c.b16 %v780, %v776
  %v1021 = vpack.c.b16 %v781, %v777
  %v1022 = vpack.c.b16 %v782, %v778
  %v1023 = vpack.c.b16 %v783, %v779
  %v1024 = vpack.c.b16 %v788, %v784
  %v1025 = vpack.c.b16 %v789, %v785
  %v1026 = vpack.c.b16 %v790, %v786
  %v1027 = vpack.c.b16 %v791, %v787
  %v1028 = vpack.c.b16 %v796, %v792
  %v1029 = vpack.c.b16 %v797, %v793
  %v1030 = vpack.c.b16 %v798, %v794
  %v1031 = vpack.c.b16 %v799, %v795
  %v1032 = vpack.c.b16 %v804, %v800
  %v1033 = vpack.c.b16 %v805, %v801
  %v1034 = vpack.c.b16 %v806, %v802
  %v1035 = vpack.c.b16 %v807, %v803
  %v1036 = vpack.c.b16 %v812, %v808
  %v1037 = vpack.c.b16 %v813, %v809
  %v1038 = vpack.c.b16 %v814, %v810
  %v1039 = vpack.c.b16 %v815, %v811
  %v1040 = vpack.c.b16 %v820, %v816
  %v1041 = vpack.c.b16 %v821, %v817
  %v1042 = vpack.c.b16 %v822, %v818
  %v1043 = vpack.c.b16 %v823, %v819
  %v1044 = vpack.c.b16 %v828, %v824
  %v1045 = vpack.c.b16 %v829, %v825
  %v1046 = vpack.c.b16 %v830, %v826
  %v1047 = vpack.c.b16 %v831, %v827
  %v1048 = vpack.c.b16 %v836, %v832
  %v1049 = vpack.c.b16 %v837, %v833
  %v1050 = vpack.c.b16 %v838, %v834
  %v1051 = vpack.c.b16 %v839, %v835
  %v1052 = vpack.c.b16 %v844, %v840
  %v1053 = vpack.c.b16 %v845, %v841
  %v1054 = vpack.c.b16 %v846, %v842
  %v1055 = vpack.c.b16 %v847, %v843
  %v1056 = vpack.c.b16 %v852, %v848
  %v1057 = vpack.c.b16 %v853, %v849
  %v1058 = vpack.c.b16 %v854, %v850
  %v1059 = vpack.c.b16 %v855, %v851
  %v1060 = vpack.c.b16 %v860, %v856
  %v1061 = vpack.c.b16 %v861, %v857
  %v1062 = vpack.c.b16 %v862, %v858
  %v1063 = vpack.c.b16 %v863, %v859
  %v1064 = vpack.c.b16 %v868, %v864
  %v1065 = vpack.c.b16 %v869, %v865
  %v1066 = vpack.c.b16 %v870, %v866
  %v1067 = vpack.c.b16 %v871, %v867
  %vm1264 = vcmask 130048
  %v1266 = vsel %vm1264, %v277, 0
  %1268 = vmatprep.subr.bf16.mxu0 %v873
  %1269 = vmatpush1.bf16.msra.mxu0 %v872
  %1270 = vmatprep.subr.bf16.mxu0 %v877
  %1271 = vmatpush1.bf16.msra.mxu0 %v876
  %1272 = vmatprep.subr.bf16.mxu0 %v881
  %1273 = vmatpush1.bf16.msra.mxu0 %v880
  %1274 = vmatprep.subr.bf16.mxu0 %v885
  %1275 = vmatpush1.bf16.msra.mxu0 %v884
  %1276 = vmatprep.subr.bf16.mxu0 %v889
  %1277 = vmatpush1.bf16.msra.mxu0 %v888
  %1278 = vmatprep.subr.bf16.mxu0 %v893
  %1279 = vmatpush1.bf16.msra.mxu0 %v892
  %1280 = vmatprep.subr.bf16.mxu0 %v897
  %1281 = vmatpush1.bf16.msra.mxu0 %v896
  %1282 = vmatprep.subr.bf16.mxu0 %v901
  %1283 = vmatpush1.bf16.msra.mxu0 %v900
  %1284 = vmatprep.subr.bf16.mxu0 %v905
  %1285 = vmatpush1.bf16.msra.mxu0 %v904
  %1286 = vmatprep.subr.bf16.mxu0 %v909
  %1287 = vmatpush1.bf16.msra.mxu0 %v908
  %1288 = vmatprep.subr.bf16.mxu0 %v913
  %1289 = vmatpush1.bf16.msra.mxu0 %v912
  %1290 = vmatprep.subr.bf16.mxu0 %v917
  %1291 = vmatpush1.bf16.msra.mxu0 %v916
  %1292 = vmatprep.subr.bf16.mxu0 %v921
  %1293 = vmatpush1.bf16.msra.mxu0 %v920
  %1294 = vmatprep.subr.bf16.mxu0 %v925
  %1295 = vmatpush1.bf16.msra.mxu0 %v924
  %1296 = vmatprep.subr.bf16.mxu0 %v929
  %1297 = vmatpush1.bf16.msra.mxu0 %v928
  %1298 = vmatprep.subr.bf16.mxu0 %v933
  %1299 = vmatpush1.bf16.msra.mxu0 %v932
  %1300 = vmatprep.mubr.bf16.mxu0 %v272
  %1301 = vmatmul.mubr.bf16.gmra.mrb[0].mxu0 %v271
  %v1302 = vpop.f32.mrb[0].mxu0
  %v1303 = vadd.f32 %v243, %v1302
  %v1304 = vpop.f32.mrb[0].mxu0
  %v1305 = vadd.f32 %v247, %v1304
  %v1306 = vpop.f32.mrb[0].mxu0
  %v1307 = vpop.f32.mrb[0].mxu0
  %1308 = vdwg.mxu0
  %1309 = vmatprep.subr.bf16.mxu0 %v937
  %1310 = vmatpush1.bf16.msra.mxu0 %v936
  %1311 = vmatprep.subr.bf16.mxu0 %v941
  %1312 = vmatpush1.bf16.msra.mxu0 %v940
  %1313 = vmatprep.subr.bf16.mxu0 %v945
  %1314 = vmatpush1.bf16.msra.mxu0 %v944
  %1315 = vmatprep.subr.bf16.mxu0 %v949
  %1316 = vmatpush1.bf16.msra.mxu0 %v948
  %1317 = vmatprep.subr.bf16.mxu0 %v953
  %1318 = vmatpush1.bf16.msra.mxu0 %v952
  %1319 = vmatprep.subr.bf16.mxu0 %v957
  %1320 = vmatpush1.bf16.msra.mxu0 %v956
  %1321 = vmatprep.subr.bf16.mxu0 %v961
  %1322 = vmatpush1.bf16.msra.mxu0 %v960
  %1323 = vmatprep.subr.bf16.mxu0 %v965
  %1324 = vmatpush1.bf16.msra.mxu0 %v964
  %1325 = vmatprep.subr.bf16.mxu0 %v969
  %1326 = vmatpush1.bf16.msra.mxu0 %v968
  %1327 = vmatprep.subr.bf16.mxu0 %v973
  %1328 = vmatpush1.bf16.msra.mxu0 %v972
  %1329 = vmatprep.subr.bf16.mxu0 %v977
  %1330 = vmatpush1.bf16.msra.mxu0 %v976
  %1331 = vmatprep.subr.bf16.mxu0 %v981
  %1332 = vmatpush1.bf16.msra.mxu0 %v980
  %1333 = vmatprep.subr.bf16.mxu0 %v985
  %1334 = vmatpush1.bf16.msra.mxu0 %v984
  %1335 = vmatprep.subr.bf16.mxu0 %v989
  %1336 = vmatpush1.bf16.msra.mxu0 %v988
  %1337 = vmatprep.subr.bf16.mxu0 %v993
  %1338 = vmatpush1.bf16.msra.mxu0 %v992
  %1339 = vmatprep.subr.bf16.mxu0 %v997
  %1340 = vmatpush1.bf16.msra.mxu0 %v996
  %1341 = vmatprep.mubr.bf16.mxu0 %v274
  %1342 = vmatmul.mubr.bf16.gmra.mrb[0].mxu0 %v273
  %v1343 = vpop.f32.mrb[0].mxu0
  %v1344 = vadd.f32 %v1303, %v1343
  %v1345 = vpop.f32.mrb[0].mxu0
  %v1346 = vadd.f32 %v1305, %v1345
  %v1347 = vpop.f32.mrb[0].mxu0
  %v1348 = vpop.f32.mrb[0].mxu0
  %1349 = vdwg.mxu0
  %1350 = vmatprep.subr.bf16.mxu0 %v1001
  %1351 = vmatpush1.bf16.msra.mxu0 %v1000
  %1352 = vmatprep.subr.bf16.mxu0 %v1005
  %1353 = vmatpush1.bf16.msra.mxu0 %v1004
  %1354 = vmatprep.subr.bf16.mxu0 %v1009
  %1355 = vmatpush1.bf16.msra.mxu0 %v1008
  %1356 = vmatprep.subr.bf16.mxu0 %v1013
  %1357 = vmatpush1.bf16.msra.mxu0 %v1012
  %1358 = vmatprep.subr.bf16.mxu0 %v1017
  %1359 = vmatpush1.bf16.msra.mxu0 %v1016
  %1360 = vmatprep.subr.bf16.mxu0 %v1021
  %1361 = vmatpush1.bf16.msra.mxu0 %v1020
  %1362 = vmatprep.subr.bf16.mxu0 %v1025
  %1363 = vmatpush1.bf16.msra.mxu0 %v1024
  %1364 = vmatprep.subr.bf16.mxu0 %v1029
  %1365 = vmatpush1.bf16.msra.mxu0 %v1028
  %1366 = vmatprep.subr.bf16.mxu0 %v1033
  %1367 = vmatpush1.bf16.msra.mxu0 %v1032
  %1368 = vmatprep.subr.bf16.mxu0 %v1037
  %1369 = vmatpush1.bf16.msra.mxu0 %v1036
  %1370 = vmatprep.subr.bf16.mxu0 %v1041
  %1371 = vmatpush1.bf16.msra.mxu0 %v1040
  %1372 = vmatprep.subr.bf16.mxu0 %v1045
  %1373 = vmatpush1.bf16.msra.mxu0 %v1044
  %1374 = vmatprep.subr.bf16.mxu0 %v1049
  %1375 = vmatpush1.bf16.msra.mxu0 %v1048
  %1376 = vmatprep.subr.bf16.mxu0 %v1053
  %1377 = vmatpush1.bf16.msra.mxu0 %v1052
  %1378 = vmatprep.subr.bf16.mxu0 %v1057
  %1379 = vmatpush1.bf16.msra.mxu0 %v1056
  %1380 = vmatprep.subr.bf16.mxu0 %v1061
  %1381 = vmatpush1.bf16.msra.mxu0 %v1060
  %1382 = vmatprep.mubr.bf16.mxu0 %v276
  %1383 = vmatmul.mubr.bf16.gmra.mrb[0].mxu0 %v275
  %v1384 = vpop.f32.mrb[0].mxu0
  %v1385 = vadd.f32 %v1344, %v1384
  %v1386 = vpop.f32.mrb[0].mxu0
  %v1387 = vadd.f32 %v1346, %v1386
  %v1388 = vpop.f32.mrb[0].mxu0
  %v1389 = vpop.f32.mrb[0].mxu0
  %1390 = vdwg.mxu0
  %1391 = vmatprep.subr.bf16.mxu0 %v1065
  %1392 = vmatpush1.bf16.msra.mxu0 %v1064
  %1393 = vmatprep.subr.bf16.mxu0 0
  %1394 = vmatpush1.bf16.msra.mxu0 0
  %1395 = vmatprep.subr.bf16.mxu0 0
  %1396 = vmatpush1.bf16.msra.mxu0 0
  %1397 = vmatprep.subr.bf16.mxu0 0
  %1398 = vmatpush1.bf16.msra.mxu0 0
  %1399 = vmatprep.subr.bf16.mxu0 0
  %1400 = vmatpush1.bf16.msra.mxu0 0
  %1401 = vmatprep.subr.bf16.mxu0 0
  %1402 = vmatpush1.bf16.msra.mxu0 0
  %1403 = vmatprep.subr.bf16.mxu0 0
  %1404 = vmatpush1.bf16.msra.mxu0 0
  %1405 = vmatprep.subr.bf16.mxu0 0
  %1406 = vmatpush1.bf16.msra.mxu0 0
  %1407 = vmatprep.subr.bf16.mxu0 0
  %1408 = vmatpush1.bf16.msra.mxu0 0
  %1409 = vmatprep.subr.bf16.mxu0 0
  %1410 = vmatpush1.bf16.msra.mxu0 0
  %1411 = vmatprep.subr.bf16.mxu0 0
  %1412 = vmatpush1.bf16.msra.mxu0 0
  %1413 = vmatprep.subr.bf16.mxu0 0
  %1414 = vmatpush1.bf16.msra.mxu0 0
  %1415 = vmatprep.subr.bf16.mxu0 0
  %1416 = vmatpush1.bf16.msra.mxu0 0
  %1417 = vmatprep.subr.bf16.mxu0 0
  %1418 = vmatpush1.bf16.msra.mxu0 0
  %1419 = vmatprep.subr.bf16.mxu0 0
  %1420 = vmatpush1.bf16.msra.mxu0 0
  %1421 = vmatprep.subr.bf16.mxu0 0
  %1422 = vmatpush1.bf16.msra.mxu0 0
  %1423 = vmatprep.mubr.bf16.mxu0 0
  %1424 = vmatmul.mubr.bf16.gmra.mrb[0].mxu0 %v1266
  %v1425 = vpop.f32.mrb[0].mxu0
  %v1426 = vadd.f32 %v1385, %v1425
  %v1427 = vpop.f32.mrb[0].mxu0
  %v1428 = vadd.f32 %v1387, %v1427
  %v1429 = vpop.f32.mrb[0].mxu0
  %v1430 = vpop.f32.mrb[0].mxu0
  %1431 = vdwg.mxu0
  %1432 = vmatprep.subr.bf16.mxu0 %v875
  %1433 = vmatpush1.bf16.msra.mxu0 %v874
  %1434 = vmatprep.subr.bf16.mxu0 %v879
  %1435 = vmatpush1.bf16.msra.mxu0 %v878
  %1436 = vmatprep.subr.bf16.mxu0 %v883
  %1437 = vmatpush1.bf16.msra.mxu0 %v882
  %1438 = vmatprep.subr.bf16.mxu0 %v887
  %1439 = vmatpush1.bf16.msra.mxu0 %v886
  %1440 = vmatprep.subr.bf16.mxu0 %v891
  %1441 = vmatpush1.bf16.msra.mxu0 %v890
  %1442 = vmatprep.subr.bf16.mxu0 %v895
  %1443 = vmatpush1.bf16.msra.mxu0 %v894
  %1444 = vmatprep.subr.bf16.mxu0 %v899
  %1445 = vmatpush1.bf16.msra.mxu0 %v898
  %1446 = vmatprep.subr.bf16.mxu0 %v903
  %1447 = vmatpush1.bf16.msra.mxu0 %v902
  %1448 = vmatprep.subr.bf16.mxu0 %v907
  %1449 = vmatpush1.bf16.msra.mxu0 %v906
  %1450 = vmatprep.subr.bf16.mxu0 %v911
  %1451 = vmatpush1.bf16.msra.mxu0 %v910
  %1452 = vmatprep.subr.bf16.mxu0 %v915
  %1453 = vmatpush1.bf16.msra.mxu0 %v914
  %1454 = vmatprep.subr.bf16.mxu0 %v919
  %1455 = vmatpush1.bf16.msra.mxu0 %v918
  %1456 = vmatprep.subr.bf16.mxu0 %v923
  %1457 = vmatpush1.bf16.msra.mxu0 %v922
  %1458 = vmatprep.subr.bf16.mxu0 %v927
  %1459 = vmatpush1.bf16.msra.mxu0 %v926
  %1460 = vmatprep.subr.bf16.mxu0 %v931
  %1461 = vmatpush1.bf16.msra.mxu0 %v930
  %1462 = vmatprep.subr.bf16.mxu0 %v935
  %1463 = vmatpush1.bf16.msra.mxu0 %v934
  %1464 = vmatprep.mubr.bf16.mxu0 %v272
  %1465 = vmatmul.mubr.bf16.gmra.mrb[0].mxu0 %v271
  %v1466 = vpop.f32.mrb[0].mxu0
  %v1467 = vadd.f32 %v251, %v1466
  %v1468 = vpop.f32.mrb[0].mxu0
  %v1469 = vadd.f32 %v255, %v1468
  %v1470 = vpop.f32.mrb[0].mxu0
  %v1471 = vpop.f32.mrb[0].mxu0
  %1472 = vdwg.mxu0
  %1473 = vmatprep.subr.bf16.mxu0 %v939
  %1474 = vmatpush1.bf16.msra.mxu0 %v938
  %1475 = vmatprep.subr.bf16.mxu0 %v943
  %1476 = vmatpush1.bf16.msra.mxu0 %v942
  %1477 = vmatprep.subr.bf16.mxu0 %v947
  %1478 = vmatpush1.bf16.msra.mxu0 %v946
  %1479 = vmatprep.subr.bf16.mxu0 %v951
  %1480 = vmatpush1.bf16.msra.mxu0 %v950
  %1481 = vmatprep.subr.bf16.mxu0 %v955
  %1482 = vmatpush1.bf16.msra.mxu0 %v954
  %1483 = vmatprep.subr.bf16.mxu0 %v959
  %1484 = vmatpush1.bf16.msra.mxu0 %v958
  %1485 = vmatprep.subr.bf16.mxu0 %v963
  %1486 = vmatpush1.bf16.msra.mxu0 %v962
  %1487 = vmatprep.subr.bf16.mxu0 %v967
  %1488 = vmatpush1.bf16.msra.mxu0 %v966
  %1489 = vmatprep.subr.bf16.mxu0 %v971
  %1490 = vmatpush1.bf16.msra.mxu0 %v970
  %1491 = vmatprep.subr.bf16.mxu0 %v975
  %1492 = vmatpush1.bf16.msra.mxu0 %v974
  %1493 = vmatprep.subr.bf16.mxu0 %v979
  %1494 = vmatpush1.bf16.msra.mxu0 %v978
  %1495 = vmatprep.subr.bf16.mxu0 %v983
  %1496 = vmatpush1.bf16.msra.mxu0 %v982
  %1497 = vmatprep.subr.bf16.mxu0 %v987
  %1498 = vmatpush1.bf16.msra.mxu0 %v986
  %1499 = vmatprep.subr.bf16.mxu0 %v991
  %1500 = vmatpush1.bf16.msra.mxu0 %v990
  %1501 = vmatprep.subr.bf16.mxu0 %v995
  %1502 = vmatpush1.bf16.msra.mxu0 %v994
  %1503 = vmatprep.subr.bf16.mxu0 %v999
  %1504 = vmatpush1.bf16.msra.mxu0 %v998
  %1505 = vmatprep.mubr.bf16.mxu0 %v274
  %1506 = vmatmul.mubr.bf16.gmra.mrb[0].mxu0 %v273
  %v1507 = vpop.f32.mrb[0].mxu0
  %v1508 = vadd.f32 %v1467, %v1507
  %v1509 = vpop.f32.mrb[0].mxu0
  %v1510 = vadd.f32 %v1469, %v1509
  %v1511 = vpop.f32.mrb[0].mxu0
  %v1512 = vpop.f32.mrb[0].mxu0
  %1513 = vdwg.mxu0
  %1514 = vmatprep.subr.bf16.mxu0 %v1003
  %1515 = vmatpush1.bf16.msra.mxu0 %v1002
  %1516 = vmatprep.subr.bf16.mxu0 %v1007
  %1517 = vmatpush1.bf16.msra.mxu0 %v1006
  %1518 = vmatprep.subr.bf16.mxu0 %v1011
  %1519 = vmatpush1.bf16.msra.mxu0 %v1010
  %1520 = vmatprep.subr.bf16.mxu0 %v1015
  %1521 = vmatpush1.bf16.msra.mxu0 %v1014
  %1522 = vmatprep.subr.bf16.mxu0 %v1019
  %1523 = vmatpush1.bf16.msra.mxu0 %v1018
  %1524 = vmatprep.subr.bf16.mxu0 %v1023
  %1525 = vmatpush1.bf16.msra.mxu0 %v1022
  %1526 = vmatprep.subr.bf16.mxu0 %v1027
  %1527 = vmatpush1.bf16.msra.mxu0 %v1026
  %1528 = vmatprep.subr.bf16.mxu0 %v1031
  %1529 = vmatpush1.bf16.msra.mxu0 %v1030
  %1530 = vmatprep.subr.bf16.mxu0 %v1035
  %1531 = vmatpush1.bf16.msra.mxu0 %v1034
  %1532 = vmatprep.subr.bf16.mxu0 %v1039
  %1533 = vmatpush1.bf16.msra.mxu0 %v1038
  %1534 = vmatprep.subr.bf16.mxu0 %v1043
  %1535 = vmatpush1.bf16.msra.mxu0 %v1042
  %1536 = vmatprep.subr.bf16.mxu0 %v1047
  %1537 = vmatpush1.bf16.msra.mxu0 %v1046
  %1538 = vmatprep.subr.bf16.mxu0 %v1051
  %1539 = vmatpush1.bf16.msra.mxu0 %v1050
  %1540 = vmatprep.subr.bf16.mxu0 %v1055
  %1541 = vmatpush1.bf16.msra.mxu0 %v1054
  %1542 = vmatprep.subr.bf16.mxu0 %v1059
  %1543 = vmatpush1.bf16.msra.mxu0 %v1058
  %1544 = vmatprep.subr.bf16.mxu0 %v1063
  %1545 = vmatpush1.bf16.msra.mxu0 %v1062
  %1546 = vmatprep.mubr.bf16.mxu0 %v276
  %1547 = vmatmul.mubr.bf16.gmra.mrb[0].mxu0 %v275
  %v1548 = vpop.f32.mrb[0].mxu0
  %v1549 = vadd.f32 %v1508, %v1548
  %v1550 = vpop.f32.mrb[0].mxu0
  %v1551 = vadd.f32 %v1510, %v1550
  %v1552 = vpop.f32.mrb[0].mxu0
  %v1553 = vpop.f32.mrb[0].mxu0
  %1554 = vdwg.mxu0
  %1555 = vmatprep.subr.bf16.mxu0 %v1067
  %1556 = vmatpush1.bf16.msra.mxu0 %v1066
  %1557 = vmatprep.subr.bf16.mxu0 0
  %1558 = vmatpush1.bf16.msra.mxu0 0
  %1559 = vmatprep.subr.bf16.mxu0 0
  %1560 = vmatpush1.bf16.msra.mxu0 0
  %1561 = vmatprep.subr.bf16.mxu0 0
  %1562 = vmatpush1.bf16.msra.mxu0 0
  %1563 = vmatprep.subr.bf16.mxu0 0
  %1564 = vmatpush1.bf16.msra.mxu0 0
  %1565 = vmatprep.subr.bf16.mxu0 0
  %1566 = vmatpush1.bf16.msra.mxu0 0
  %1567 = vmatprep.subr.bf16.mxu0 0
  %1568 = vmatpush1.bf16.msra.mxu0 0
  %1569 = vmatprep.subr.bf16.mxu0 0
  %1570 = vmatpush1.bf16.msra.mxu0 0
  %1571 = vmatprep.subr.bf16.mxu0 0
  %1572 = vmatpush1.bf16.msra.mxu0 0
  %1573 = vmatprep.subr.bf16.mxu0 0
  %1574 = vmatpush1.bf16.msra.mxu0 0
  %1575 = vmatprep.subr.bf16.mxu0 0
  %1576 = vmatpush1.bf16.msra.mxu0 0
  %1577 = vmatprep.subr.bf16.mxu0 0
  %1578 = vmatpush1.bf16.msra.mxu0 0
  %1579 = vmatprep.subr.bf16.mxu0 0
  %1580 = vmatpush1.bf16.msra.mxu0 0
  %1581 = vmatprep.subr.bf16.mxu0 0
  %1582 = vmatpush1.bf16.msra.mxu0 0
  %1583 = vmatprep.subr.bf16.mxu0 0
  %1584 = vmatpush1.bf16.msra.mxu0 0
  %1585 = vmatprep.subr.bf16.mxu0 0
  %1586 = vmatpush1.bf16.msra.mxu0 0
  %1587 = vmatprep.mubr.bf16.mxu0 0
  %1588 = vmatmul.mubr.bf16.gmra.mrb[0].mxu0 %v1266
  %v1589 = vpop.f32.mrb[0].mxu0
  %v1590 = vadd.f32 %v1549, %v1589
  %v1591 = vpop.f32.mrb[0].mxu0
  %v1592 = vadd.f32 %v1551, %v1591
  %v1593 = vpop.f32.mrb[0].mxu0
  %v1594 = vpop.f32.mrb[0].mxu0
  %1595 = vdwg.mxu0
  %v1596 = vmax.f32 %v1426, 0.0
  %v1597 = vmax.f32 %v1428, 0.0
  %v1598 = vmax.f32 %v1590, 0.0
  %v1599 = vmax.f32 %v1592, 0.0
  %v1600 = vpack.c.bf16 %v1596, %v1596
  %v1601 = vpack.c.bf16 %v1597, %v1597
  %v1602 = vpack.c.bf16 %v1598, %v1598
  %v1603 = vpack.c.bf16 %v1599, %v1599
  %v1604 = vld [vmem:[%s3] sm:$0xf]
  %v1605 = vld [vmem:[%s3 + $0x4] sm:$0xf]
  %v1606 = vld [vmem:[%s3 + $0x8] sm:$0xf]
  %v1607 = vld [vmem:[%s3 + $0xc] sm:$0xf]
  %v1608 = vld [vmem:[%s3 + $0x10] sm:$0xf]
  %v1609 = vld [vmem:[%s3 + $0x14] sm:$0xf]
  %v1610 = vld [vmem:[%s3 + $0x18] sm:$0xf]
  %v1611 = vld [vmem:[%s3 + $0x1c] sm:$0xf]
  %v1612 = vld [vmem:[%s3 + $0x20] sm:$0xf]
  %v1613 = vld [vmem:[%s3 + $0x24] sm:$0xf]
  %v1614 = vld [vmem:[%s3 + $0x28] sm:$0xf]
  %v1615 = vld [vmem:[%s3 + $0x2c] sm:$0xf]
  %v1616 = vld [vmem:[%s3 + $0x30] sm:$0xf]
  %v1617 = vld [vmem:[%s3 + $0x34] sm:$0xf]
  %v1618 = vld [vmem:[%s3 + $0x38] sm:$0xf]
  %v1619 = vld [vmem:[%s3 + $0x3c] sm:$0xf]
  %v1620 = vld [vmem:[%s3 + $0x40] sm:$0xf]
  %v1621 = vld [vmem:[%s3 + $0x44] sm:$0xf]
  %v1622 = vld [vmem:[%s3 + $0x48] sm:$0xf]
  %v1623 = vld [vmem:[%s3 + $0x4c] sm:$0xf]
  %v1624 = vld [vmem:[%s3 + $0x50] sm:$0xf]
  %v1625 = vld [vmem:[%s3 + $0x54] sm:$0xf]
  %v1626 = vld [vmem:[%s3 + $0x58] sm:$0xf]
  %v1627 = vld [vmem:[%s3 + $0x5c] sm:$0xf]
  %v1628 = vld [vmem:[%s3 + $0x60] sm:$0xf]
  %v1629 = vld [vmem:[%s3 + $0x64] sm:$0xf]
  %v1630 = vld [vmem:[%s3 + $0x68] sm:$0xf]
  %v1631 = vld [vmem:[%s3 + $0x6c] sm:$0xf]
  %v1632 = vld [vmem:[%s3 + $0x70] sm:$0xf]
  %v1633 = vld [vmem:[%s3 + $0x74] sm:$0xf]
  %v1634 = vld [vmem:[%s3 + $0x78] sm:$0xf]
  %v1635 = vld [vmem:[%s3 + $0x7c] sm:$0xf]
  %v1636 = vld [vmem:[%s3 + $0x80] sm:$0xf]
  %v1637 = vld [vmem:[%s3 + $0x84] sm:$0xf]
  %v1638 = vld [vmem:[%s3 + $0x88] sm:$0xf]
  %v1639 = vld [vmem:[%s3 + $0x8c] sm:$0xf]
  %v1640 = vld [vmem:[%s3 + $0x90] sm:$0xf]
  %v1641 = vld [vmem:[%s3 + $0x94] sm:$0xf]
  %v1642 = vld [vmem:[%s3 + $0x98] sm:$0xf]
  %v1643 = vld [vmem:[%s3 + $0x9c] sm:$0xf]
  %v1644 = vld [vmem:[%s3 + $0xa0] sm:$0xf]
  %v1645 = vld [vmem:[%s3 + $0xa4] sm:$0xf]
  %v1646 = vld [vmem:[%s3 + $0xa8] sm:$0xf]
  %v1647 = vld [vmem:[%s3 + $0xac] sm:$0xf]
  %v1648 = vld [vmem:[%s3 + $0xb0] sm:$0xf]
  %v1649 = vld [vmem:[%s3 + $0xb4] sm:$0xf]
  %v1650 = vld [vmem:[%s3 + $0xb8] sm:$0xf]
  %v1651 = vld [vmem:[%s3 + $0xbc] sm:$0xf]
  %v1652 = vld [vmem:[%s3 + $0xc0] sm:$0xf]
  %v1653 = vld [vmem:[%s3 + $0xc4] sm:$0xf]
  %v1654 = vld [vmem:[%s4] sm:$0x1]
  %v1656 = vlaneseq
  %v1657 = vshrl.u32 %v1656, 7
  %v1658 = vsub.s32 0, %v1657
  %v1659 = vrot.slane %v1654, %v1658
  %v1711 = vunpack.c.l.b16 %v1604
  %v1712 = vunpack.c.l.b16 %v1605
  %v1713 = vunpack.c.l.b16 %v1606
  %v1714 = vunpack.c.l.b16 %v1607
  %v1715 = vunpack.c.l.b16 %v1608
  %v1716 = vunpack.c.l.b16 %v1609
  %v1717 = vunpack.c.l.b16 %v1610
  %v1718 = vunpack.c.l.b16 %v1611
  %v1719 = vunpack.c.l.b16 %v1612
  %v1720 = vunpack.c.l.b16 %v1613
  %v1721 = vunpack.c.l.b16 %v1614
  %v1722 = vunpack.c.l.b16 %v1615
  %v1723 = vunpack.c.l.b16 %v1616
  %v1724 = vunpack.c.l.b16 %v1617
  %v1725 = vunpack.c.l.b16 %v1618
  %v1726 = vunpack.c.l.b16 %v1619
  %v1727 = vunpack.c.l.b16 %v1620
  %v1728 = vunpack.c.l.b16 %v1621
  %v1729 = vunpack.c.l.b16 %v1622
  %v1730 = vunpack.c.l.b16 %v1623
  %v1731 = vunpack.c.l.b16 %v1624
  %v1732 = vunpack.c.l.b16 %v1625
  %v1733 = vunpack.c.l.b16 %v1626
  %v1734 = vunpack.c.l.b16 %v1627
  %v1735 = vunpack.c.l.b16 %v1628
  %v1736 = vunpack.c.l.b16 %v1629
  %v1737 = vunpack.c.l.b16 %v1630
  %v1738 = vunpack.c.l.b16 %v1631
  %v1739 = vunpack.c.l.b16 %v1632
  %v1740 = vunpack.c.l.b16 %v1633
  %v1741 = vunpack.c.l.b16 %v1634
  %v1742 = vunpack.c.l.b16 %v1635
  %v1743 = vunpack.c.l.b16 %v1636
  %v1744 = vunpack.c.l.b16 %v1637
  %v1745 = vunpack.c.l.b16 %v1638
  %v1746 = vunpack.c.l.b16 %v1639
  %v1747 = vunpack.c.l.b16 %v1640
  %v1748 = vunpack.c.l.b16 %v1641
  %v1749 = vunpack.c.l.b16 %v1642
  %v1750 = vunpack.c.l.b16 %v1643
  %v1751 = vunpack.c.l.b16 %v1644
  %v1752 = vunpack.c.l.b16 %v1645
  %v1753 = vunpack.c.l.b16 %v1646
  %v1754 = vunpack.c.l.b16 %v1647
  %v1755 = vunpack.c.l.b16 %v1648
  %v1756 = vunpack.c.l.b16 %v1649
  %v1757 = vunpack.c.l.b16 %v1650
  %v1758 = vunpack.c.l.b16 %v1651
  %v1759 = vunpack.c.l.b16 %v1652
  %v1760 = vunpack.c.l.b16 %v1653
  %v1761 = vpack.c.b16 %v1712, %v1711
  %v1762 = vpack.c.b16 %v1714, %v1713
  %v1763 = vpack.c.b16 %v1716, %v1715
  %v1764 = vpack.c.b16 %v1718, %v1717
  %v1765 = vpack.c.b16 %v1720, %v1719
  %v1766 = vpack.c.b16 %v1722, %v1721
  %v1767 = vpack.c.b16 %v1724, %v1723
  %v1768 = vpack.c.b16 %v1726, %v1725
  %v1769 = vpack.c.b16 %v1728, %v1727
  %v1770 = vpack.c.b16 %v1730, %v1729
  %v1771 = vpack.c.b16 %v1732, %v1731
  %v1772 = vpack.c.b16 %v1734, %v1733
  %v1773 = vpack.c.b16 %v1736, %v1735
  %v1774 = vpack.c.b16 %v1738, %v1737
  %v1775 = vpack.c.b16 %v1740, %v1739
  %v1776 = vpack.c.b16 %v1742, %v1741
  %v1777 = vpack.c.b16 %v1744, %v1743
  %v1778 = vpack.c.b16 %v1746, %v1745
  %v1779 = vpack.c.b16 %v1748, %v1747
  %v1780 = vpack.c.b16 %v1750, %v1749
  %v1781 = vpack.c.b16 %v1752, %v1751
  %v1782 = vpack.c.b16 %v1754, %v1753
  %v1783 = vpack.c.b16 %v1756, %v1755
  %v1784 = vpack.c.b16 %v1758, %v1757
  %v1785 = vpack.c.b16 %v1760, %v1759
  %v1812 = vsel %vm1264, %v1603, 0
  %1814 = vmatprep.subr.bf16.mxu0 0
  %1815 = vmatpush1.bf16.msra.mxu0 %v1761
  %1816 = vmatprep.subr.bf16.mxu0 0
  %1817 = vmatpush1.bf16.msra.mxu0 %v1762
  %1818 = vmatprep.subr.bf16.mxu0 0
  %1819 = vmatpush1.bf16.msra.mxu0 %v1763
  %1820 = vmatprep.subr.bf16.mxu0 0
  %1821 = vmatpush1.bf16.msra.mxu0 %v1764
  %1822 = vmatprep.subr.bf16.mxu0 0
  %1823 = vmatpush1.bf16.msra.mxu0 %v1765
  %1824 = vmatprep.subr.bf16.mxu0 0
  %1825 = vmatpush1.bf16.msra.mxu0 %v1766
  %1826 = vmatprep.subr.bf16.mxu0 0
  %1827 = vmatpush1.bf16.msra.mxu0 %v1767
  %1828 = vmatprep.subr.bf16.mxu0 0
  %1829 = vmatpush1.bf16.msra.mxu0 %v1768
  %1830 = vmatprep.subr.bf16.mxu0 0
  %1831 = vmatpush1.bf16.msra.mxu0 %v1769
  %1832 = vmatprep.subr.bf16.mxu0 0
  %1833 = vmatpush1.bf16.msra.mxu0 %v1770
  %1834 = vmatprep.subr.bf16.mxu0 0
  %1835 = vmatpush1.bf16.msra.mxu0 %v1771
  %1836 = vmatprep.subr.bf16.mxu0 0
  %1837 = vmatpush1.bf16.msra.mxu0 %v1772
  %1838 = vmatprep.subr.bf16.mxu0 0
  %1839 = vmatpush1.bf16.msra.mxu0 %v1773
  %1840 = vmatprep.subr.bf16.mxu0 0
  %1841 = vmatpush1.bf16.msra.mxu0 %v1774
  %1842 = vmatprep.subr.bf16.mxu0 0
  %1843 = vmatpush1.bf16.msra.mxu0 %v1775
  %1844 = vmatprep.subr.bf16.mxu0 0
  %1845 = vmatpush1.bf16.msra.mxu0 %v1776
  %1846 = vmatprep.mubr.bf16.mxu0 %v1601
  %1847 = vmatmul.mubr.bf16.gmra.mrb[0].mxu0 %v1600
  %v1848 = vpop.f32.mrb[0].mxu0
  %v1849 = vadd.f32 %v1659, %v1848
  %v1850 = vpop.f32.mrb[0].mxu0
  %v1851 = vpop.f32.mrb[0].mxu0
  %v1852 = vpop.f32.mrb[0].mxu0
  %1853 = vdwg.mxu0
  %1854 = vmatprep.subr.bf16.mxu0 0
  %1855 = vmatpush1.bf16.msra.mxu0 %v1777
  %1856 = vmatprep.subr.bf16.mxu0 0
  %1857 = vmatpush1.bf16.msra.mxu0 %v1778
  %1858 = vmatprep.subr.bf16.mxu0 0
  %1859 = vmatpush1.bf16.msra.mxu0 %v1779
  %1860 = vmatprep.subr.bf16.mxu0 0
  %1861 = vmatpush1.bf16.msra.mxu0 %v1780
  %1862 = vmatprep.subr.bf16.mxu0 0
  %1863 = vmatpush1.bf16.msra.mxu0 %v1781
  %1864 = vmatprep.subr.bf16.mxu0 0
  %1865 = vmatpush1.bf16.msra.mxu0 %v1782
  %1866 = vmatprep.subr.bf16.mxu0 0
  %1867 = vmatpush1.bf16.msra.mxu0 %v1783
  %1868 = vmatprep.subr.bf16.mxu0 0
  %1869 = vmatpush1.bf16.msra.mxu0 %v1784
  %1870 = vmatprep.subr.bf16.mxu0 0
  %1871 = vmatpush1.bf16.msra.mxu0 %v1785
  %1872 = vmatprep.subr.bf16.mxu0 0
  %1873 = vmatpush1.bf16.msra.mxu0 0
  %1874 = vmatprep.subr.bf16.mxu0 0
  %1875 = vmatpush1.bf16.msra.mxu0 0
  %1876 = vmatprep.subr.bf16.mxu0 0
  %1877 = vmatpush1.bf16.msra.mxu0 0
  %1878 = vmatprep.subr.bf16.mxu0 0
  %1879 = vmatpush1.bf16.msra.mxu0 0
  %1880 = vmatprep.subr.bf16.mxu0 0
  %1881 = vmatpush1.bf16.msra.mxu0 0
  %1882 = vmatprep.subr.bf16.mxu0 0
  %1883 = vmatpush1.bf16.msra.mxu0 0
  %1884 = vmatprep.subr.bf16.mxu0 0
  %1885 = vmatpush1.bf16.msra.mxu0 0
  %1886 = vmatprep.mubr.bf16.mxu0 %v1812
  %1887 = vmatmul.mubr.bf16.gmra.mrb[0].mxu0 %v1602
  %v1888 = vpop.f32.mrb[0].mxu0
  %v1889 = vadd.f32 %v1849, %v1888
  %v1890 = vpop.f32.mrb[0].mxu0
  %v1891 = vpop.f32.mrb[0].mxu0
  %v1892 = vpop.f32.mrb[0].mxu0
  %1893 = vdwg.mxu0
  %v1894 = vmul.f32 %v1889, 0.5
  %v1895 = vmul.f32 %v1894, 1.442695
  %v1896 = vpow.pop %v1895
  %v1897 = vld [vmem:[%s9] sm:$0xff]
  %1899 = vrot.lane.b32.xlu0 %v1896, 108
  %v1900 = vpop.permute.xlu0 %1899
  %v1902 = vmul.f32 %v1897, %v1900
  %v1903 = vadd.f32 %v1889, %v1902
  %v1904 = vpack.c.bf16 %v1903, %v1903
  %v1905 = vld [vmem:[%s5] sm:$0xff]
  %v1906 = vld [vmem:[%s5 + $0x8] sm:$0xff]
  %v1907 = vld [vmem:[%s5 + $0x10] sm:$0xff]
  %v1908 = vld [vmem:[%s5 + $0x18] sm:$0xff]
  %v1909 = vld [vmem:[%s5 + $0x20] sm:$0x33]
  %v1910 = vld [vmem:[%s5 + $0x28] sm:$0x33]
  %v1911 = vld [vmem:[%s6] sm:$0xf]
  %v1913 = vlaneseq
  %v1914 = vshrl.u32 %v1913, 7
  %v1915 = vsub.s32 0, %v1914
  %v1916 = vrot.slane %v1911, %v1915
  %v1917 = vlaneseq
  %v1918 = vshrl.u32 %v1917, 7
  %v1919 = vsub.s32 1, %v1918
  %v1920 = vrot.slane %v1911, %v1919
  %v1921 = vlaneseq
  %v1922 = vshrl.u32 %v1921, 7
  %v1923 = vsub.s32 2, %v1922
  %v1924 = vrot.slane %v1911, %v1923
  %v1925 = vlaneseq
  %v1926 = vshrl.u32 %v1925, 7
  %v1927 = vsub.s32 3, %v1926
  %v1928 = vrot.slane %v1911, %v1927
  %v1939 = vunpack.c.l.b16 %v1905
  %v1940 = vunpack.c.h.b16 %v1905
  %v1941 = vunpack.c.l.b16 %v1906
  %v1942 = vunpack.c.h.b16 %v1906
  %v1943 = vunpack.c.l.b16 %v1907
  %v1944 = vunpack.c.h.b16 %v1907
  %v1945 = vunpack.c.l.b16 %v1908
  %v1946 = vunpack.c.h.b16 %v1908
  %v1947 = vunpack.c.l.b16 %v1909
  %v1948 = vunpack.c.h.b16 %v1909
  %v1949 = vunpack.c.l.b16 %v1910
  %v1950 = vunpack.c.h.b16 %v1910
  %v1951 = vpack.c.b16 %v1943, %v1939
  %v1952 = vpack.c.b16 %v1944, %v1940
  %v1953 = vpack.c.b16 %v1945, %v1941
  %v1954 = vpack.c.b16 %v1946, %v1942
  %v1955 = vpack.c.b16 %v1947, %v1947
  %v1956 = vpack.c.b16 %v1948, %v1948
  %v1957 = vpack.c.b16 %v1949, %v1949
  %v1958 = vpack.c.b16 %v1950, %v1950
  %vm1963 = vcmask 162816
  %v1965 = vsel %vm1963, %v1904, 0
  %vm1967 = vcmask 1041408
  %v1969 = vsel %vm1967, %v1955, 0
  %v1972 = vsel %vm1967, %v1956, 0
  %v1975 = vsel %vm1967, %v1957, 0
  %v1978 = vsel %vm1967, %v1958, 0
  %1980 = vmatprep.subr.bf16.mxu0 %v1952
  %1981 = vmatpush1.bf16.msra.mxu0 %v1951
  %1982 = vmatprep.subr.bf16.mxu0 %v1972
  %1983 = vmatpush1.bf16.msra.mxu0 %v1969
  %1984 = vmatprep.subr.bf16.mxu0 0
  %1985 = vmatpush1.bf16.msra.mxu0 0
  %1986 = vmatprep.subr.bf16.mxu0 0
  %1987 = vmatpush1.bf16.msra.mxu0 0
  %1988 = vmatprep.subr.bf16.mxu0 0
  %1989 = vmatpush1.bf16.msra.mxu0 0
  %1990 = vmatprep.subr.bf16.mxu0 0
  %1991 = vmatpush1.bf16.msra.mxu0 0
  %1992 = vmatprep.subr.bf16.mxu0 0
  %1993 = vmatpush1.bf16.msra.mxu0 0
  %1994 = vmatprep.subr.bf16.mxu0 0
  %1995 = vmatpush1.bf16.msra.mxu0 0
  %1996 = vmatprep.subr.bf16.mxu0 0
  %1997 = vmatpush1.bf16.msra.mxu0 0
  %1998 = vmatprep.subr.bf16.mxu0 0
  %1999 = vmatpush1.bf16.msra.mxu0 0
  %2000 = vmatprep.subr.bf16.mxu0 0
  %2001 = vmatpush1.bf16.msra.mxu0 0
  %2002 = vmatprep.subr.bf16.mxu0 0
  %2003 = vmatpush1.bf16.msra.mxu0 0
  %2004 = vmatprep.subr.bf16.mxu0 0
  %2005 = vmatpush1.bf16.msra.mxu0 0
  %2006 = vmatprep.subr.bf16.mxu0 0
  %2007 = vmatpush1.bf16.msra.mxu0 0
  %2008 = vmatprep.subr.bf16.mxu0 0
  %2009 = vmatpush1.bf16.msra.mxu0 0
  %2010 = vmatprep.subr.bf16.mxu0 0
  %2011 = vmatpush1.bf16.msra.mxu0 0
  %2012 = vmatprep.mubr.bf16.mxu0 0
  %2013 = vmatmul.mubr.bf16.gmra.mrb[0].mxu0 %v1965
  %v2014 = vpop.f32.mrb[0].mxu0
  %v2015 = vadd.f32 %v1916, %v2014
  %v2016 = vpop.f32.mrb[0].mxu0
  %v2017 = vadd.f32 %v1920, %v2016
  %v2018 = vpop.f32.mrb[0].mxu0
  %v2019 = vpop.f32.mrb[0].mxu0
  %2020 = vdwg.mxu0
  %2021 = vmatprep.subr.bf16.mxu0 %v1954
  %2022 = vmatpush1.bf16.msra.mxu0 %v1953
  %2023 = vmatprep.subr.bf16.mxu0 %v1978
  %2024 = vmatpush1.bf16.msra.mxu0 %v1975
  %2025 = vmatprep.subr.bf16.mxu0 0
  %2026 = vmatpush1.bf16.msra.mxu0 0
  %2027 = vmatprep.subr.bf16.mxu0 0
  %2028 = vmatpush1.bf16.msra.mxu0 0
  %2029 = vmatprep.subr.bf16.mxu0 0
  %2030 = vmatpush1.bf16.msra.mxu0 0
  %2031 = vmatprep.subr.bf16.mxu0 0
  %2032 = vmatpush1.bf16.msra.mxu0 0
  %2033 = vmatprep.subr.bf16.mxu0 0
  %2034 = vmatpush1.bf16.msra.mxu0 0
  %2035 = vmatprep.subr.bf16.mxu0 0
  %2036 = vmatpush1.bf16.msra.mxu0 0
  %2037 = vmatprep.subr.bf16.mxu0 0
  %2038 = vmatpush1.bf16.msra.mxu0 0
  %2039 = vmatprep.subr.bf16.mxu0 0
  %2040 = vmatpush1.bf16.msra.mxu0 0
  %2041 = vmatprep.subr.bf16.mxu0 0
  %2042 = vmatpush1.bf16.msra.mxu0 0
  %2043 = vmatprep.subr.bf16.mxu0 0
  %2044 = vmatpush1.bf16.msra.mxu0 0
  %2045 = vmatprep.subr.bf16.mxu0 0
  %2046 = vmatpush1.bf16.msra.mxu0 0
  %2047 = vmatprep.subr.bf16.mxu0 0
  %2048 = vmatpush1.bf16.msra.mxu0 0
  %2049 = vmatprep.subr.bf16.mxu0 0
  %2050 = vmatpush1.bf16.msra.mxu0 0
  %2051 = vmatprep.subr.bf16.mxu0 0
  %2052 = vmatpush1.bf16.msra.mxu0 0
  %2053 = vmatprep.mubr.bf16.mxu0 0
  %2054 = vmatmul.mubr.bf16.gmra.mrb[0].mxu0 %v1965
  %v2055 = vpop.f32.mrb[0].mxu0
  %v2056 = vadd.f32 %v1924, %v2055
  %v2057 = vpop.f32.mrb[0].mxu0
  %v2058 = vadd.f32 %v1928, %v2057
  %v2059 = vpop.f32.mrb[0].mxu0
  %v2060 = vpop.f32.mrb[0].mxu0
  %2061 = vdwg.mxu0
  %v2062 = vmax.f32 %v2015, 0.0
  %v2063 = vmax.f32 %v2017, 0.0
  %v2064 = vmax.f32 %v2056, 0.0
  %v2065 = vmax.f32 %v2058, 0.0
  %v2066 = vpack.c.bf16 %v2062, %v2062
  %v2067 = vpack.c.bf16 %v2063, %v2063
  %v2068 = vpack.c.bf16 %v2064, %v2064
  %v2069 = vpack.c.bf16 %v2065, %v2065
  %v2070 = vld [vmem:[%s7] sm:$0xff]
  %v2071 = vld [vmem:[%s7 + $0x8] sm:$0xff]
  %v2072 = vld [vmem:[%s7 + $0x10] sm:$0xff]
  %v2073 = vld [vmem:[%s7 + $0x18] sm:$0xf]
  %v2074 = vld [vmem:[%s7 + $0x1c] sm:$0xff]
  %v2075 = vld [vmem:[%s7 + $0x24] sm:$0xff]
  %v2076 = vld [vmem:[%s7 + $0x2c] sm:$0xff]
  %v2077 = vld [vmem:[%s7 + $0x34] sm:$0xf]
  %v2078 = vld [vmem:[%s7 + $0x38] sm:$0xff]
  %v2079 = vld [vmem:[%s7 + $0x40] sm:$0xff]
  %v2080 = vld [vmem:[%s7 + $0x48] sm:$0xff]
  %v2081 = vld [vmem:[%s7 + $0x50] sm:$0xf]
  %v2082 = vld [vmem:[%s7 + $0x54] sm:$0xff]
  %v2083 = vld [vmem:[%s7 + $0x5c] sm:$0xff]
  %v2084 = vld [vmem:[%s7 + $0x64] sm:$0xff]
  %v2085 = vld [vmem:[%s7 + $0x6c] sm:$0xf]
  %v2086 = vld [vmem:[%s7 + $0x70] sm:$0xff]
  %v2087 = vld [vmem:[%s7 + $0x78] sm:$0xff]
  %v2088 = vld [vmem:[%s7 + $0x80] sm:$0xff]
  %v2089 = vld [vmem:[%s7 + $0x88] sm:$0xf]
  %v2090 = vld [vmem:[%s7 + $0x8c] sm:$0xff]
  %v2091 = vld [vmem:[%s7 + $0x94] sm:$0xff]
  %v2092 = vld [vmem:[%s7 + $0x9c] sm:$0xff]
  %v2093 = vld [vmem:[%s7 + $0xa4] sm:$0xf]
  %v2094 = vld [vmem:[%s7 + $0xa8] sm:$0xff]
  %v2095 = vld [vmem:[%s7 + $0xb0] sm:$0xff]
  %v2096 = vld [vmem:[%s7 + $0xb8] sm:$0xff]
  %v2097 = vld [vmem:[%s7 + $0xc0] sm:$0xf]
  %v2098 = vld [vmem:[%s7 + $0xc4] sm:$0xff]
  %v2099 = vld [vmem:[%s7 + $0xcc] sm:$0xff]
  %v2100 = vld [vmem:[%s7 + $0xd4] sm:$0xff]
  %v2101 = vld [vmem:[%s7 + $0xdc] sm:$0xf]
  %v2102 = vld [vmem:[%s7 + $0xe0] sm:$0xff]
  %v2103 = vld [vmem:[%s7 + $0xe8] sm:$0xff]
  %v2104 = vld [vmem:[%s7 + $0xf0] sm:$0xff]
  %v2105 = vld [vmem:[%s7 + $0xf8] sm:$0xf]
  %v2106 = vld [vmem:[%s7 + $0xfc] sm:$0xff]
  %v2107 = vld [vmem:[%s7 + $0x104] sm:$0xff]
  %v2108 = vld [vmem:[%s7 + $0x10c] sm:$0xff]
  %v2109 = vld [vmem:[%s7 + $0x114] sm:$0xf]
  %v2110 = vld [vmem:[%s7 + $0x118] sm:$0xff]
  %v2111 = vld [vmem:[%s7 + $0x120] sm:$0xff]
  %v2112 = vld [vmem:[%s7 + $0x128] sm:$0xff]
  %v2113 = vld [vmem:[%s7 + $0x130] sm:$0xf]
  %v2114 = vld [vmem:[%s7 + $0x134] sm:$0xff]
  %v2115 = vld [vmem:[%s7 + $0x13c] sm:$0xff]
  %v2116 = vld [vmem:[%s7 + $0x144] sm:$0xff]
  %v2117 = vld [vmem:[%s7 + $0x14c] sm:$0xf]
  %v2118 = vld [vmem:[%s7 + $0x150] sm:$0xff]
  %v2119 = vld [vmem:[%s7 + $0x158] sm:$0xff]
  %v2120 = vld [vmem:[%s7 + $0x160] sm:$0xff]
  %v2121 = vld [vmem:[%s7 + $0x168] sm:$0xf]
  %v2122 = vld [vmem:[%s7 + $0x16c] sm:$0xff]
  %v2123 = vld [vmem:[%s7 + $0x174] sm:$0xff]
  %v2124 = vld [vmem:[%s7 + $0x17c] sm:$0xff]
  %v2125 = vld [vmem:[%s7 + $0x184] sm:$0xf]
  %v2126 = vld [vmem:[%s7 + $0x188] sm:$0xff]
  %v2127 = vld [vmem:[%s7 + $0x190] sm:$0xff]
  %v2128 = vld [vmem:[%s7 + $0x198] sm:$0xff]
  %v2129 = vld [vmem:[%s7 + $0x1a0] sm:$0xf]
  %v2130 = vld [vmem:[%s7 + $0x1a4] sm:$0xff]
  %v2131 = vld [vmem:[%s7 + $0x1ac] sm:$0xff]
  %v2132 = vld [vmem:[%s7 + $0x1b4] sm:$0xff]
  %v2133 = vld [vmem:[%s7 + $0x1bc] sm:$0xf]
  %v2134 = vld [vmem:[%s7 + $0x1c0] sm:$0xff]
  %v2135 = vld [vmem:[%s7 + $0x1c8] sm:$0xff]
  %v2136 = vld [vmem:[%s7 + $0x1d0] sm:$0xff]
  %v2137 = vld [vmem:[%s7 + $0x1d8] sm:$0xf]
  %v2138 = vld [vmem:[%s7 + $0x1dc] sm:$0xff]
  %v2139 = vld [vmem:[%s7 + $0x1e4] sm:$0xff]
  %v2140 = vld [vmem:[%s7 + $0x1ec] sm:$0xff]
  %v2141 = vld [vmem:[%s7 + $0x1f4] sm:$0xf]
  %v2142 = vld [vmem:[%s7 + $0x1f8] sm:$0xff]
  %v2143 = vld [vmem:[%s7 + $0x200] sm:$0xff]
  %v2144 = vld [vmem:[%s7 + $0x208] sm:$0xff]
  %v2145 = vld [vmem:[%s7 + $0x210] sm:$0xf]
  %v2146 = vld [vmem:[%s7 + $0x214] sm:$0xff]
  %v2147 = vld [vmem:[%s7 + $0x21c] sm:$0xff]
  %v2148 = vld [vmem:[%s7 + $0x224] sm:$0xff]
  %v2149 = vld [vmem:[%s7 + $0x22c] sm:$0xf]
  %v2150 = vld [vmem:[%s7 + $0x230] sm:$0xff]
  %v2151 = vld [vmem:[%s7 + $0x238] sm:$0xff]
  %v2152 = vld [vmem:[%s7 + $0x240] sm:$0xff]
  %v2153 = vld [vmem:[%s7 + $0x248] sm:$0xf]
  %v2154 = vld [vmem:[%s7 + $0x24c] sm:$0xff]
  %v2155 = vld [vmem:[%s7 + $0x254] sm:$0xff]
  %v2156 = vld [vmem:[%s7 + $0x25c] sm:$0xff]
  %v2157 = vld [vmem:[%s7 + $0x264] sm:$0xf]
  %v2158 = vld [vmem:[%s7 + $0x268] sm:$0xff]
  %v2159 = vld [vmem:[%s7 + $0x270] sm:$0xff]
  %v2160 = vld [vmem:[%s7 + $0x278] sm:$0xff]
  %v2161 = vld [vmem:[%s7 + $0x280] sm:$0xf]
  %v2162 = vld [vmem:[%s7 + $0x284] sm:$0xff]
  %v2163 = vld [vmem:[%s7 + $0x28c] sm:$0xff]
  %v2164 = vld [vmem:[%s7 + $0x294] sm:$0xff]
  %v2165 = vld [vmem:[%s7 + $0x29c] sm:$0xf]
  %v2166 = vld [vmem:[%s7 + $0x2a0] sm:$0xff]
  %v2167 = vld [vmem:[%s7 + $0x2a8] sm:$0xff]
  %v2168 = vld [vmem:[%s7 + $0x2b0] sm:$0xff]
  %v2169 = vld [vmem:[%s7 + $0x2b8] sm:$0xf]
  %v2170 = vld [vmem:[%s7 + $0x2bc] sm:$0xff]
  %v2171 = vld [vmem:[%s7 + $0x2c4] sm:$0xff]
  %v2172 = vld [vmem:[%s7 + $0x2cc] sm:$0xff]
  %v2173 = vld [vmem:[%s7 + $0x2d4] sm:$0xf]
  %v2174 = vld [vmem:[%s7 + $0x2d8] sm:$0xff]
  %v2175 = vld [vmem:[%s7 + $0x2e0] sm:$0xff]
  %v2176 = vld [vmem:[%s7 + $0x2e8] sm:$0xff]
  %v2177 = vld [vmem:[%s7 + $0x2f0] sm:$0xf]
  %v2178 = vld [vmem:[%s7 + $0x2f4] sm:$0xff]
  %v2179 = vld [vmem:[%s7 + $0x2fc] sm:$0xff]
  %v2180 = vld [vmem:[%s7 + $0x304] sm:$0xff]
  %v2181 = vld [vmem:[%s7 + $0x30c] sm:$0xf]
  %v2182 = vld [vmem:[%s7 + $0x310] sm:$0xff]
  %v2183 = vld [vmem:[%s7 + $0x318] sm:$0xff]
  %v2184 = vld [vmem:[%s7 + $0x320] sm:$0xff]
  %v2185 = vld [vmem:[%s7 + $0x328] sm:$0xf]
  %v2186 = vld [vmem:[%s7 + $0x32c] sm:$0xff]
  %v2187 = vld [vmem:[%s7 + $0x334] sm:$0xff]
  %v2188 = vld [vmem:[%s7 + $0x33c] sm:$0xff]
  %v2189 = vld [vmem:[%s7 + $0x344] sm:$0xf]
  %v2190 = vld [vmem:[%s7 + $0x348] sm:$0xff]
  %v2191 = vld [vmem:[%s7 + $0x350] sm:$0xff]
  %v2192 = vld [vmem:[%s7 + $0x358] sm:$0xff]
  %v2193 = vld [vmem:[%s7 + $0x360] sm:$0xf]
  %v2194 = vld [vmem:[%s7 + $0x364] sm:$0xff]
  %v2195 = vld [vmem:[%s7 + $0x36c] sm:$0xff]
  %v2196 = vld [vmem:[%s7 + $0x374] sm:$0xff]
  %v2197 = vld [vmem:[%s7 + $0x37c] sm:$0xf]
  %v2198 = vld [vmem:[%s7 + $0x380] sm:$0xff]
  %v2199 = vld [vmem:[%s7 + $0x388] sm:$0xff]
  %v2200 = vld [vmem:[%s7 + $0x390] sm:$0xff]
  %v2201 = vld [vmem:[%s7 + $0x398] sm:$0xf]
  %v2202 = vld [vmem:[%s7 + $0x39c] sm:$0xff]
  %v2203 = vld [vmem:[%s7 + $0x3a4] sm:$0xff]
  %v2204 = vld [vmem:[%s7 + $0x3ac] sm:$0xff]
  %v2205 = vld [vmem:[%s7 + $0x3b4] sm:$0xf]
  %v2206 = vld [vmem:[%s7 + $0x3b8] sm:$0xff]
  %v2207 = vld [vmem:[%s7 + $0x3c0] sm:$0xff]
  %v2208 = vld [vmem:[%s7 + $0x3c8] sm:$0xff]
  %v2209 = vld [vmem:[%s7 + $0x3d0] sm:$0xf]
  %v2210 = vld [vmem:[%s7 + $0x3d4] sm:$0xff]
  %v2211 = vld [vmem:[%s7 + $0x3dc] sm:$0xff]
  %v2212 = vld [vmem:[%s7 + $0x3e4] sm:$0xff]
  %v2213 = vld [vmem:[%s7 + $0x3ec] sm:$0xf]
  %v2214 = vld [vmem:[%s7 + $0x3f0] sm:$0xff]
  %v2215 = vld [vmem:[%s7 + $0x3f8] sm:$0xff]
  %v2216 = vld [vmem:[%s7 + $0x400] sm:$0xff]
  %v2217 = vld [vmem:[%s7 + $0x408] sm:$0xf]
  %v2218 = vld [vmem:[%s7 + $0x40c] sm:$0xff]
  %v2219 = vld [vmem:[%s7 + $0x414] sm:$0xff]
  %v2220 = vld [vmem:[%s7 + $0x41c] sm:$0xff]
  %v2221 = vld [vmem:[%s7 + $0x424] sm:$0xf]
  %v2222 = vld [vmem:[%s7 + $0x428] sm:$0xff]
  %v2223 = vld [vmem:[%s7 + $0x430] sm:$0xff]
  %v2224 = vld [vmem:[%s7 + $0x438] sm:$0xff]
  %v2225 = vld [vmem:[%s7 + $0x440] sm:$0xf]
  %v2226 = vld [vmem:[%s7 + $0x444] sm:$0xff]
  %v2227 = vld [vmem:[%s7 + $0x44c] sm:$0xff]
  %v2228 = vld [vmem:[%s7 + $0x454] sm:$0xff]
  %v2229 = vld [vmem:[%s7 + $0x45c] sm:$0xf]
  %v2230 = vld [vmem:[%s7 + $0x460] sm:$0xff]
  %v2231 = vld [vmem:[%s7 + $0x468] sm:$0xff]
  %v2232 = vld [vmem:[%s7 + $0x470] sm:$0xff]
  %v2233 = vld [vmem:[%s7 + $0x478] sm:$0xf]
  %v2234 = vld [vmem:[%s7 + $0x47c] sm:$0xff]
  %v2235 = vld [vmem:[%s7 + $0x484] sm:$0xff]
  %v2236 = vld [vmem:[%s7 + $0x48c] sm:$0xff]
  %v2237 = vld [vmem:[%s7 + $0x494] sm:$0xf]
  %v2238 = vld [vmem:[%s7 + $0x498] sm:$0xff]
  %v2239 = vld [vmem:[%s7 + $0x4a0] sm:$0xff]
  %v2240 = vld [vmem:[%s7 + $0x4a8] sm:$0xff]
  %v2241 = vld [vmem:[%s7 + $0x4b0] sm:$0xf]
  %v2242 = vld [vmem:[%s7 + $0x4b4] sm:$0xff]
  %v2243 = vld [vmem:[%s7 + $0x4bc] sm:$0xff]
  %v2244 = vld [vmem:[%s7 + $0x4c4] sm:$0xff]
  %v2245 = vld [vmem:[%s7 + $0x4cc] sm:$0xf]
  %v2246 = vld [vmem:[%s7 + $0x4d0] sm:$0xff]
  %v2247 = vld [vmem:[%s7 + $0x4d8] sm:$0xff]
  %v2248 = vld [vmem:[%s7 + $0x4e0] sm:$0xff]
  %v2249 = vld [vmem:[%s7 + $0x4e8] sm:$0xf]
  %v2250 = vld [vmem:[%s7 + $0x4ec] sm:$0xff]
  %v2251 = vld [vmem:[%s7 + $0x4f4] sm:$0xff]
  %v2252 = vld [vmem:[%s7 + $0x4fc] sm:$0xff]
  %v2253 = vld [vmem:[%s7 + $0x504] sm:$0xf]
  %v2254 = vld [vmem:[%s7 + $0x508] sm:$0xff]
  %v2255 = vld [vmem:[%s7 + $0x510] sm:$0xff]
  %v2256 = vld [vmem:[%s7 + $0x518] sm:$0xff]
  %v2257 = vld [vmem:[%s7 + $0x520] sm:$0xf]
  %v2258 = vld [vmem:[%s7 + $0x524] sm:$0xff]
  %v2259 = vld [vmem:[%s7 + $0x52c] sm:$0xff]
  %v2260 = vld [vmem:[%s7 + $0x534] sm:$0xff]
  %v2261 = vld [vmem:[%s7 + $0x53c] sm:$0xf]
  %v2262 = vld [vmem:[%s7 + $0x540] sm:$0xff]
  %v2263 = vld [vmem:[%s7 + $0x548] sm:$0xff]
  %v2264 = vld [vmem:[%s7 + $0x550] sm:$0xff]
  %v2265 = vld [vmem:[%s7 + $0x558] sm:$0xf]
  %v2266 = vld [vmem:[%s7 + $0x55c] sm:$0xff]
  %v2267 = vld [vmem:[%s7 + $0x564] sm:$0xff]
  %v2268 = vld [vmem:[%s7 + $0x56c] sm:$0xff]
  %v2269 = vld [vmem:[%s7 + $0x574] sm:$0xf]
  %v2270 = vld [vmem:[%s8] sm:$0x7f]
  %v2272 = vlaneseq
  %v2273 = vshrl.u32 %v2272, 7
  %v2274 = vsub.s32 0, %v2273
  %v2275 = vrot.slane %v2270, %v2274
  %v2276 = vlaneseq
  %v2277 = vshrl.u32 %v2276, 7
  %v2278 = vsub.s32 1, %v2277
  %v2279 = vrot.slane %v2270, %v2278
  %v2280 = vlaneseq
  %v2281 = vshrl.u32 %v2280, 7
  %v2282 = vsub.s32 2, %v2281
  %v2283 = vrot.slane %v2270, %v2282
  %v2284 = vlaneseq
  %v2285 = vshrl.u32 %v2284, 7
  %v2286 = vsub.s32 3, %v2285
  %v2287 = vrot.slane %v2270, %v2286
  %v2288 = vlaneseq
  %v2289 = vshrl.u32 %v2288, 7
  %v2290 = vsub.s32 4, %v2289
  %v2291 = vrot.slane %v2270, %v2290
  %v2292 = vlaneseq
  %v2293 = vshrl.u32 %v2292, 7
  %v2294 = vsub.s32 5, %v2293
  %v2295 = vrot.slane %v2270, %v2294
  %v2296 = vlaneseq
  %v2297 = vshrl.u32 %v2296, 7
  %v2298 = vsub.s32 6, %v2297
  %v2299 = vrot.slane %v2270, %v2298
  %v2507 = vunpack.c.l.b16 %v2070
  %v2508 = vunpack.c.h.b16 %v2070
  %v2509 = vunpack.c.l.b16 %v2071
  %v2510 = vunpack.c.h.b16 %v2071
  %v2511 = vunpack.c.l.b16 %v2072
  %v2512 = vunpack.c.h.b16 %v2072
  %v2513 = vunpack.c.l.b16 %v2073
  %v2514 = vunpack.c.l.b16 %v2074
  %v2515 = vunpack.c.h.b16 %v2074
  %v2516 = vunpack.c.l.b16 %v2075
  %v2517 = vunpack.c.h.b16 %v2075
  %v2518 = vunpack.c.l.b16 %v2076
  %v2519 = vunpack.c.h.b16 %v2076
  %v2520 = vunpack.c.l.b16 %v2077
  %v2521 = vunpack.c.l.b16 %v2078
  %v2522 = vunpack.c.h.b16 %v2078
  %v2523 = vunpack.c.l.b16 %v2079
  %v2524 = vunpack.c.h.b16 %v2079
  %v2525 = vunpack.c.l.b16 %v2080
  %v2526 = vunpack.c.h.b16 %v2080
  %v2527 = vunpack.c.l.b16 %v2081
  %v2528 = vunpack.c.l.b16 %v2082
  %v2529 = vunpack.c.h.b16 %v2082
  %v2530 = vunpack.c.l.b16 %v2083
  %v2531 = vunpack.c.h.b16 %v2083
  %v2532 = vunpack.c.l.b16 %v2084
  %v2533 = vunpack.c.h.b16 %v2084
  %v2534 = vunpack.c.l.b16 %v2085
  %v2535 = vunpack.c.l.b16 %v2086
  %v2536 = vunpack.c.h.b16 %v2086
  %v2537 = vunpack.c.l.b16 %v2087
  %v2538 = vunpack.c.h.b16 %v2087
  %v2539 = vunpack.c.l.b16 %v2088
  %v2540 = vunpack.c.h.b16 %v2088
  %v2541 = vunpack.c.l.b16 %v2089
  %v2542 = vunpack.c.l.b16 %v2090
  %v2543 = vunpack.c.h.b16 %v2090
  %v2544 = vunpack.c.l.b16 %v2091
  %v2545 = vunpack.c.h.b16 %v2091
  %v2546 = vunpack.c.l.b16 %v2092
  %v2547 = vunpack.c.h.b16 %v2092
  %v2548 = vunpack.c.l.b16 %v2093
  %v2549 = vunpack.c.l.b16 %v2094
  %v2550 = vunpack.c.h.b16 %v2094
  %v2551 = vunpack.c.l.b16 %v2095
  %v2552 = vunpack.c.h.b16 %v2095
  %v2553 = vunpack.c.l.b16 %v2096
  %v2554 = vunpack.c.h.b16 %v2096
  %v2555 = vunpack.c.l.b16 %v2097
  %v2556 = vunpack.c.l.b16 %v2098
  %v2557 = vunpack.c.h.b16 %v2098
  %v2558 = vunpack.c.l.b16 %v2099
  %v2559 = vunpack.c.h.b16 %v2099
  %v2560 = vunpack.c.l.b16 %v2100
  %v2561 = vunpack.c.h.b16 %v2100
  %v2562 = vunpack.c.l.b16 %v2101
  %v2563 = vunpack.c.l.b16 %v2102
  %v2564 = vunpack.c.h.b16 %v2102
  %v2565 = vunpack.c.l.b16 %v2103
  %v2566 = vunpack.c.h.b16 %v2103
  %v2567 = vunpack.c.l.b16 %v2104
  %v2568 = vunpack.c.h.b16 %v2104
  %v2569 = vunpack.c.l.b16 %v2105
  %v2570 = vunpack.c.l.b16 %v2106
  %v2571 = vunpack.c.h.b16 %v2106
  %v2572 = vunpack.c.l.b16 %v2107
  %v2573 = vunpack.c.h.b16 %v2107
  %v2574 = vunpack.c.l.b16 %v2108
  %v2575 = vunpack.c.h.b16 %v2108
  %v2576 = vunpack.c.l.b16 %v2109
  %v2577 = vunpack.c.l.b16 %v2110
  %v2578 = vunpack.c.h.b16 %v2110
  %v2579 = vunpack.c.l.b16 %v2111
  %v2580 = vunpack.c.h.b16 %v2111
  %v2581 = vunpack.c.l.b16 %v2112
  %v2582 = vunpack.c.h.b16 %v2112
  %v2583 = vunpack.c.l.b16 %v2113
  %v2584 = vunpack.c.l.b16 %v2114
  %v2585 = vunpack.c.h.b16 %v2114
  %v2586 = vunpack.c.l.b16 %v2115
  %v2587 = vunpack.c.h.b16 %v2115
  %v2588 = vunpack.c.l.b16 %v2116
  %v2589 = vunpack.c.h.b16 %v2116
  %v2590 = vunpack.c.l.b16 %v2117
  %v2591 = vunpack.c.l.b16 %v2118
  %v2592 = vunpack.c.h.b16 %v2118
  %v2593 = vunpack.c.l.b16 %v2119
  %v2594 = vunpack.c.h.b16 %v2119
  %v2595 = vunpack.c.l.b16 %v2120
  %v2596 = vunpack.c.h.b16 %v2120
  %v2597 = vunpack.c.l.b16 %v2121
  %v2598 = vunpack.c.l.b16 %v2122
  %v2599 = vunpack.c.h.b16 %v2122
  %v2600 = vunpack.c.l.b16 %v2123
  %v2601 = vunpack.c.h.b16 %v2123
  %v2602 = vunpack.c.l.b16 %v2124
  %v2603 = vunpack.c.h.b16 %v2124
  %v2604 = vunpack.c.l.b16 %v2125
  %v2605 = vunpack.c.l.b16 %v2126
  %v2606 = vunpack.c.h.b16 %v2126
  %v2607 = vunpack.c.l.b16 %v2127
  %v2608 = vunpack.c.h.b16 %v2127
  %v2609 = vunpack.c.l.b16 %v2128
  %v2610 = vunpack.c.h.b16 %v2128
  %v2611 = vunpack.c.l.b16 %v2129
  %v2612 = vunpack.c.l.b16 %v2130
  %v2613 = vunpack.c.h.b16 %v2130
  %v2614 = vunpack.c.l.b16 %v2131
  %v2615 = vunpack.c.h.b16 %v2131
  %v2616 = vunpack.c.l.b16 %v2132
  %v2617 = vunpack.c.h.b16 %v2132
  %v2618 = vunpack.c.l.b16 %v2133
  %v2619 = vunpack.c.l.b16 %v2134
  %v2620 = vunpack.c.h.b16 %v2134
  %v2621 = vunpack.c.l.b16 %v2135
  %v2622 = vunpack.c.h.b16 %v2135
  %v2623 = vunpack.c.l.b16 %v2136
  %v2624 = vunpack.c.h.b16 %v2136
  %v2625 = vunpack.c.l.b16 %v2137
  %v2626 = vunpack.c.l.b16 %v2138
  %v2627 = vunpack.c.h.b16 %v2138
  %v2628 = vunpack.c.l.b16 %v2139
  %v2629 = vunpack.c.h.b16 %v2139
  %v2630 = vunpack.c.l.b16 %v2140
  %v2631 = vunpack.c.h.b16 %v2140
  %v2632 = vunpack.c.l.b16 %v2141
  %v2633 = vunpack.c.l.b16 %v2142
  %v2634 = vunpack.c.h.b16 %v2142
  %v2635 = vunpack.c.l.b16 %v2143
  %v2636 = vunpack.c.h.b16 %v2143
  %v2637 = vunpack.c.l.b16 %v2144
  %v2638 = vunpack.c.h.b16 %v2144
  %v2639 = vunpack.c.l.b16 %v2145
  %v2640 = vunpack.c.l.b16 %v2146
  %v2641 = vunpack.c.h.b16 %v2146
  %v2642 = vunpack.c.l.b16 %v2147
  %v2643 = vunpack.c.h.b16 %v2147
  %v2644 = vunpack.c.l.b16 %v2148
  %v2645 = vunpack.c.h.b16 %v2148
  %v2646 = vunpack.c.l.b16 %v2149
  %v2647 = vunpack.c.l.b16 %v2150
  %v2648 = vunpack.c.h.b16 %v2150
  %v2649 = vunpack.c.l.b16 %v2151
  %v2650 = vunpack.c.h.b16 %v2151
  %v2651 = vunpack.c.l.b16 %v2152
  %v2652 = vunpack.c.h.b16 %v2152
  %v2653 = vunpack.c.l.b16 %v2153
  %v2654 = vunpack.c.l.b16 %v2154
  %v2655 = vunpack.c.h.b16 %v2154
  %v2656 = vunpack.c.l.b16 %v2155
  %v2657 = vunpack.c.h.b16 %v2155
  %v2658 = vunpack.c.l.b16 %v2156
  %v2659 = vunpack.c.h.b16 %v2156
  %v2660 = vunpack.c.l.b16 %v2157
  %v2661 = vunpack.c.l.b16 %v2158
  %v2662 = vunpack.c.h.b16 %v2158
  %v2663 = vunpack.c.l.b16 %v2159
  %v2664 = vunpack.c.h.b16 %v2159
  %v2665 = vunpack.c.l.b16 %v2160
  %v2666 = vunpack.c.h.b16 %v2160
  %v2667 = vunpack.c.l.b16 %v2161
  %v2668 = vunpack.c.l.b16 %v2162
  %v2669 = vunpack.c.h.b16 %v2162
  %v2670 = vunpack.c.l.b16 %v2163
  %v2671 = vunpack.c.h.b16 %v2163
  %v2672 = vunpack.c.l.b16 %v2164
  %v2673 = vunpack.c.h.b16 %v2164
  %v2674 = vunpack.c.l.b16 %v2165
  %v2675 = vunpack.c.l.b16 %v2166
  %v2676 = vunpack.c.h.b16 %v2166
  %v2677 = vunpack.c.l.b16 %v2167
  %v2678 = vunpack.c.h.b16 %v2167
  %v2679 = vunpack.c.l.b16 %v2168
  %v2680 = vunpack.c.h.b16 %v2168
  %v2681 = vunpack.c.l.b16 %v2169
  %v2682 = vunpack.c.l.b16 %v2170
  %v2683 = vunpack.c.h.b16 %v2170
  %v2684 = vunpack.c.l.b16 %v2171
  %v2685 = vunpack.c.h.b16 %v2171
  %v2686 = vunpack.c.l.b16 %v2172
  %v2687 = vunpack.c.h.b16 %v2172
  %v2688 = vunpack.c.l.b16 %v2173
  %v2689 = vunpack.c.l.b16 %v2174
  %v2690 = vunpack.c.h.b16 %v2174
  %v2691 = vunpack.c.l.b16 %v2175
  %v2692 = vunpack.c.h.b16 %v2175
  %v2693 = vunpack.c.l.b16 %v2176
  %v2694 = vunpack.c.h.b16 %v2176
  %v2695 = vunpack.c.l.b16 %v2177
  %v2696 = vunpack.c.l.b16 %v2178
  %v2697 = vunpack.c.h.b16 %v2178
  %v2698 = vunpack.c.l.b16 %v2179
  %v2699 = vunpack.c.h.b16 %v2179
  %v2700 = vunpack.c.l.b16 %v2180
  %v2701 = vunpack.c.h.b16 %v2180
  %v2702 = vunpack.c.l.b16 %v2181
  %v2703 = vunpack.c.l.b16 %v2182
  %v2704 = vunpack.c.h.b16 %v2182
  %v2705 = vunpack.c.l.b16 %v2183
  %v2706 = vunpack.c.h.b16 %v2183
  %v2707 = vunpack.c.l.b16 %v2184
  %v2708 = vunpack.c.h.b16 %v2184
  %v2709 = vunpack.c.l.b16 %v2185
  %v2710 = vunpack.c.l.b16 %v2186
  %v2711 = vunpack.c.h.b16 %v2186
  %v2712 = vunpack.c.l.b16 %v2187
  %v2713 = vunpack.c.h.b16 %v2187
  %v2714 = vunpack.c.l.b16 %v2188
  %v2715 = vunpack.c.h.b16 %v2188
  %v2716 = vunpack.c.l.b16 %v2189
  %v2717 = vunpack.c.l.b16 %v2190
  %v2718 = vunpack.c.h.b16 %v2190
  %v2719 = vunpack.c.l.b16 %v2191
  %v2720 = vunpack.c.h.b16 %v2191
  %v2721 = vunpack.c.l.b16 %v2192
  %v2722 = vunpack.c.h.b16 %v2192
  %v2723 = vunpack.c.l.b16 %v2193
  %v2724 = vunpack.c.l.b16 %v2194
  %v2725 = vunpack.c.h.b16 %v2194
  %v2726 = vunpack.c.l.b16 %v2195
  %v2727 = vunpack.c.h.b16 %v2195
  %v2728 = vunpack.c.l.b16 %v2196
  %v2729 = vunpack.c.h.b16 %v2196
  %v2730 = vunpack.c.l.b16 %v2197
  %v2731 = vunpack.c.l.b16 %v2198
  %v2732 = vunpack.c.h.b16 %v2198
  %v2733 = vunpack.c.l.b16 %v2199
  %v2734 = vunpack.c.h.b16 %v2199
  %v2735 = vunpack.c.l.b16 %v2200
  %v2736 = vunpack.c.h.b16 %v2200
  %v2737 = vunpack.c.l.b16 %v2201
  %v2738 = vunpack.c.l.b16 %v2202
  %v2739 = vunpack.c.h.b16 %v2202
  %v2740 = vunpack.c.l.b16 %v2203
  %v2741 = vunpack.c.h.b16 %v2203
  %v2742 = vunpack.c.l.b16 %v2204
  %v2743 = vunpack.c.h.b16 %v2204
  %v2744 = vunpack.c.l.b16 %v2205
  %v2745 = vunpack.c.l.b16 %v2206
  %v2746 = vunpack.c.h.b16 %v2206
  %v2747 = vunpack.c.l.b16 %v2207
  %v2748 = vunpack.c.h.b16 %v2207
  %v2749 = vunpack.c.l.b16 %v2208
  %v2750 = vunpack.c.h.b16 %v2208
  %v2751 = vunpack.c.l.b16 %v2209
  %v2752 = vunpack.c.l.b16 %v2210
  %v2753 = vunpack.c.h.b16 %v2210
  %v2754 = vunpack.c.l.b16 %v2211
  %v2755 = vunpack.c.h.b16 %v2211
  %v2756 = vunpack.c.l.b16 %v2212
  %v2757 = vunpack.c.h.b16 %v2212
  %v2758 = vunpack.c.l.b16 %v2213
  %v2759 = vunpack.c.l.b16 %v2214
  %v2760 = vunpack.c.h.b16 %v2214
  %v2761 = vunpack.c.l.b16 %v2215
  %v2762 = vunpack.c.h.b16 %v2215
  %v2763 = vunpack.c.l.b16 %v2216
  %v2764 = vunpack.c.h.b16 %v2216
  %v2765 = vunpack.c.l.b16 %v2217
  %v2766 = vunpack.c.l.b16 %v2218
  %v2767 = vunpack.c.h.b16 %v2218
  %v2768 = vunpack.c.l.b16 %v2219
  %v2769 = vunpack.c.h.b16 %v2219
  %v2770 = vunpack.c.l.b16 %v2220
  %v2771 = vunpack.c.h.b16 %v2220
  %v2772 = vunpack.c.l.b16 %v2221
  %v2773 = vunpack.c.l.b16 %v2222
  %v2774 = vunpack.c.h.b16 %v2222
  %v2775 = vunpack.c.l.b16 %v2223
  %v2776 = vunpack.c.h.b16 %v2223
  %v2777 = vunpack.c.l.b16 %v2224
  %v2778 = vunpack.c.h.b16 %v2224
  %v2779 = vunpack.c.l.b16 %v2225
  %v2780 = vunpack.c.l.b16 %v2226
  %v2781 = vunpack.c.h.b16 %v2226
  %v2782 = vunpack.c.l.b16 %v2227
  %v2783 = vunpack.c.h.b16 %v2227
  %v2784 = vunpack.c.l.b16 %v2228
  %v2785 = vunpack.c.h.b16 %v2228
  %v2786 = vunpack.c.l.b16 %v2229
  %v2787 = vunpack.c.l.b16 %v2230
  %v2788 = vunpack.c.h.b16 %v2230
  %v2789 = vunpack.c.l.b16 %v2231
  %v2790 = vunpack.c.h.b16 %v2231
  %v2791 = vunpack.c.l.b16 %v2232
  %v2792 = vunpack.c.h.b16 %v2232
  %v2793 = vunpack.c.l.b16 %v2233
  %v2794 = vunpack.c.l.b16 %v2234
  %v2795 = vunpack.c.h.b16 %v2234
  %v2796 = vunpack.c.l.b16 %v2235
  %v2797 = vunpack.c.h.b16 %v2235
  %v2798 = vunpack.c.l.b16 %v2236
  %v2799 = vunpack.c.h.b16 %v2236
  %v2800 = vunpack.c.l.b16 %v2237
  %v2801 = vunpack.c.l.b16 %v2238
  %v2802 = vunpack.c.h.b16 %v2238
  %v2803 = vunpack.c.l.b16 %v2239
  %v2804 = vunpack.c.h.b16 %v2239
  %v2805 = vunpack.c.l.b16 %v2240
  %v2806 = vunpack.c.h.b16 %v2240
  %v2807 = vunpack.c.l.b16 %v2241
  %v2808 = vunpack.c.l.b16 %v2242
  %v2809 = vunpack.c.h.b16 %v2242
  %v2810 = vunpack.c.l.b16 %v2243
  %v2811 = vunpack.c.h.b16 %v2243
  %v2812 = vunpack.c.l.b16 %v2244
  %v2813 = vunpack.c.h.b16 %v2244
  %v2814 = vunpack.c.l.b16 %v2245
  %v2815 = vunpack.c.l.b16 %v2246
  %v2816 = vunpack.c.h.b16 %v2246
  %v2817 = vunpack.c.l.b16 %v2247
  %v2818 = vunpack.c.h.b16 %v2247
  %v2819 = vunpack.c.l.b16 %v2248
  %v2820 = vunpack.c.h.b16 %v2248
  %v2821 = vunpack.c.l.b16 %v2249
  %v2822 = vunpack.c.l.b16 %v2250
  %v2823 = vunpack.c.h.b16 %v2250
  %v2824 = vunpack.c.l.b16 %v2251
  %v2825 = vunpack.c.h.b16 %v2251
  %v2826 = vunpack.c.l.b16 %v2252
  %v2827 = vunpack.c.h.b16 %v2252
  %v2828 = vunpack.c.l.b16 %v2253
  %v2829 = vunpack.c.l.b16 %v2254
  %v2830 = vunpack.c.h.b16 %v2254
  %v2831 = vunpack.c.l.b16 %v2255
  %v2832 = vunpack.c.h.b16 %v2255
  %v2833 = vunpack.c.l.b16 %v2256
  %v2834 = vunpack.c.h.b16 %v2256
  %v2835 = vunpack.c.l.b16 %v2257
  %v2836 = vunpack.c.l.b16 %v2258
  %v2837 = vunpack.c.h.b16 %v2258
  %v2838 = vunpack.c.l.b16 %v2259
  %v2839 = vunpack.c.h.b16 %v2259
  %v2840 = vunpack.c.l.b16 %v2260
  %v2841 = vunpack.c.h.b16 %v2260
  %v2842 = vunpack.c.l.b16 %v2261
  %v2843 = vunpack.c.l.b16 %v2262
  %v2844 = vunpack.c.h.b16 %v2262
  %v2845 = vunpack.c.l.b16 %v2263
  %v2846 = vunpack.c.h.b16 %v2263
  %v2847 = vunpack.c.l.b16 %v2264
  %v2848 = vunpack.c.h.b16 %v2264
  %v2849 = vunpack.c.l.b16 %v2265
  %v2850 = vunpack.c.l.b16 %v2266
  %v2851 = vunpack.c.h.b16 %v2266
  %v2852 = vunpack.c.l.b16 %v2267
  %v2853 = vunpack.c.h.b16 %v2267
  %v2854 = vunpack.c.l.b16 %v2268
  %v2855 = vunpack.c.h.b16 %v2268
  %v2856 = vunpack.c.l.b16 %v2269
  %v2857 = vpack.c.b16 %v2514, %v2507
  %v2858 = vpack.c.b16 %v2515, %v2508
  %v2859 = vpack.c.b16 %v2516, %v2509
  %v2860 = vpack.c.b16 %v2517, %v2510
  %v2861 = vpack.c.b16 %v2518, %v2511
  %v2862 = vpack.c.b16 %v2519, %v2512
  %v2863 = vpack.c.b16 %v2520, %v2513
  %v2864 = vpack.c.b16 %v2528, %v2521
  %v2865 = vpack.c.b16 %v2529, %v2522
  %v2866 = vpack.c.b16 %v2530, %v2523
  %v2867 = vpack.c.b16 %v2531, %v2524
  %v2868 = vpack.c.b16 %v2532, %v2525
  %v2869 = vpack.c.b16 %v2533, %v2526
  %v2870 = vpack.c.b16 %v2534, %v2527
  %v2871 = vpack.c.b16 %v2542, %v2535
  %v2872 = vpack.c.b16 %v2543, %v2536
  %v2873 = vpack.c.b16 %v2544, %v2537
  %v2874 = vpack.c.b16 %v2545, %v2538
  %v2875 = vpack.c.b16 %v2546, %v2539
  %v2876 = vpack.c.b16 %v2547, %v2540
  %v2877 = vpack.c.b16 %v2548, %v2541
  %v2878 = vpack.c.b16 %v2556, %v2549
  %v2879 = vpack.c.b16 %v2557, %v2550
  %v2880 = vpack.c.b16 %v2558, %v2551
  %v2881 = vpack.c.b16 %v2559, %v2552
  %v2882 = vpack.c.b16 %v2560, %v2553
  %v2883 = vpack.c.b16 %v2561, %v2554
  %v2884 = vpack.c.b16 %v2562, %v2555
  %v2885 = vpack.c.b16 %v2570, %v2563
  %v2886 = vpack.c.b16 %v2571, %v2564
  %v2887 = vpack.c.b16 %v2572, %v2565
  %v2888 = vpack.c.b16 %v2573, %v2566
  %v2889 = vpack.c.b16 %v2574, %v2567
  %v2890 = vpack.c.b16 %v2575, %v2568
  %v2891 = vpack.c.b16 %v2576, %v2569
  %v2892 = vpack.c.b16 %v2584, %v2577
  %v2893 = vpack.c.b16 %v2585, %v2578
  %v2894 = vpack.c.b16 %v2586, %v2579
  %v2895 = vpack.c.b16 %v2587, %v2580
  %v2896 = vpack.c.b16 %v2588, %v2581
  %v2897 = vpack.c.b16 %v2589, %v2582
  %v2898 = vpack.c.b16 %v2590, %v2583
  %v2899 = vpack.c.b16 %v2598, %v2591
  %v2900 = vpack.c.b16 %v2599, %v2592
  %v2901 = vpack.c.b16 %v2600, %v2593
  %v2902 = vpack.c.b16 %v2601, %v2594
  %v2903 = vpack.c.b16 %v2602, %v2595
  %v2904 = vpack.c.b16 %v2603, %v2596
  %v2905 = vpack.c.b16 %v2604, %v2597
  %v2906 = vpack.c.b16 %v2612, %v2605
  %v2907 = vpack.c.b16 %v2613, %v2606
  %v2908 = vpack.c.b16 %v2614, %v2607
  %v2909 = vpack.c.b16 %v2615, %v2608
  %v2910 = vpack.c.b16 %v2616, %v2609
  %v2911 = vpack.c.b16 %v2617, %v2610
  %v2912 = vpack.c.b16 %v2618, %v2611
  %v2913 = vpack.c.b16 %v2626, %v2619
  %v2914 = vpack.c.b16 %v2627, %v2620
  %v2915 = vpack.c.b16 %v2628, %v2621
  %v2916 = vpack.c.b16 %v2629, %v2622
  %v2917 = vpack.c.b16 %v2630, %v2623
  %v2918 = vpack.c.b16 %v2631, %v2624
  %v2919 = vpack.c.b16 %v2632, %v2625
  %v2920 = vpack.c.b16 %v2640, %v2633
  %v2921 = vpack.c.b16 %v2641, %v2634
  %v2922 = vpack.c.b16 %v2642, %v2635
  %v2923 = vpack.c.b16 %v2643, %v2636
  %v2924 = vpack.c.b16 %v2644, %v2637
  %v2925 = vpack.c.b16 %v2645, %v2638
  %v2926 = vpack.c.b16 %v2646, %v2639
  %v2927 = vpack.c.b16 %v2654, %v2647
  %v2928 = vpack.c.b16 %v2655, %v2648
  %v2929 = vpack.c.b16 %v2656, %v2649
  %v2930 = vpack.c.b16 %v2657, %v2650
  %v2931 = vpack.c.b16 %v2658, %v2651
  %v2932 = vpack.c.b16 %v2659, %v2652
  %v2933 = vpack.c.b16 %v2660, %v2653
  %v2934 = vpack.c.b16 %v2668, %v2661
  %v2935 = vpack.c.b16 %v2669, %v2662
  %v2936 = vpack.c.b16 %v2670, %v2663
  %v2937 = vpack.c.b16 %v2671, %v2664
  %v2938 = vpack.c.b16 %v2672, %v2665
  %v2939 = vpack.c.b16 %v2673, %v2666
  %v2940 = vpack.c.b16 %v2674, %v2667
  %v2941 = vpack.c.b16 %v2682, %v2675
  %v2942 = vpack.c.b16 %v2683, %v2676
  %v2943 = vpack.c.b16 %v2684, %v2677
  %v2944 = vpack.c.b16 %v2685, %v2678
  %v2945 = vpack.c.b16 %v2686, %v2679
  %v2946 = vpack.c.b16 %v2687, %v2680
  %v2947 = vpack.c.b16 %v2688, %v2681
  %v2948 = vpack.c.b16 %v2696, %v2689
  %v2949 = vpack.c.b16 %v2697, %v2690
  %v2950 = vpack.c.b16 %v2698, %v2691
  %v2951 = vpack.c.b16 %v2699, %v2692
  %v2952 = vpack.c.b16 %v2700, %v2693
  %v2953 = vpack.c.b16 %v2701, %v2694
  %v2954 = vpack.c.b16 %v2702, %v2695
  %v2955 = vpack.c.b16 %v2710, %v2703
  %v2956 = vpack.c.b16 %v2711, %v2704
  %v2957 = vpack.c.b16 %v2712, %v2705
  %v2958 = vpack.c.b16 %v2713, %v2706
  %v2959 = vpack.c.b16 %v2714, %v2707
  %v2960 = vpack.c.b16 %v2715, %v2708
  %v2961 = vpack.c.b16 %v2716, %v2709
  %v2962 = vpack.c.b16 %v2724, %v2717
  %v2963 = vpack.c.b16 %v2725, %v2718
  %v2964 = vpack.c.b16 %v2726, %v2719
  %v2965 = vpack.c.b16 %v2727, %v2720
  %v2966 = vpack.c.b16 %v2728, %v2721
  %v2967 = vpack.c.b16 %v2729, %v2722
  %v2968 = vpack.c.b16 %v2730, %v2723
  %v2969 = vpack.c.b16 %v2738, %v2731
  %v2970 = vpack.c.b16 %v2739, %v2732
  %v2971 = vpack.c.b16 %v2740, %v2733
  %v2972 = vpack.c.b16 %v2741, %v2734
  %v2973 = vpack.c.b16 %v2742, %v2735
  %v2974 = vpack.c.b16 %v2743, %v2736
  %v2975 = vpack.c.b16 %v2744, %v2737
  %v2976 = vpack.c.b16 %v2752, %v2745
  %v2977 = vpack.c.b16 %v2753, %v2746
  %v2978 = vpack.c.b16 %v2754, %v2747
  %v2979 = vpack.c.b16 %v2755, %v2748
  %v2980 = vpack.c.b16 %v2756, %v2749
  %v2981 = vpack.c.b16 %v2757, %v2750
  %v2982 = vpack.c.b16 %v2758, %v2751
  %v2983 = vpack.c.b16 %v2766, %v2759
  %v2984 = vpack.c.b16 %v2767, %v2760
  %v2985 = vpack.c.b16 %v2768, %v2761
  %v2986 = vpack.c.b16 %v2769, %v2762
  %v2987 = vpack.c.b16 %v2770, %v2763
  %v2988 = vpack.c.b16 %v2771, %v2764
  %v2989 = vpack.c.b16 %v2772, %v2765
  %v2990 = vpack.c.b16 %v2780, %v2773
  %v2991 = vpack.c.b16 %v2781, %v2774
  %v2992 = vpack.c.b16 %v2782, %v2775
  %v2993 = vpack.c.b16 %v2783, %v2776
  %v2994 = vpack.c.b16 %v2784, %v2777
  %v2995 = vpack.c.b16 %v2785, %v2778
  %v2996 = vpack.c.b16 %v2786, %v2779
  %v2997 = vpack.c.b16 %v2794, %v2787
  %v2998 = vpack.c.b16 %v2795, %v2788
  %v2999 = vpack.c.b16 %v2796, %v2789
  %v3000 = vpack.c.b16 %v2797, %v2790
  %v3001 = vpack.c.b16 %v2798, %v2791
  %v3002 = vpack.c.b16 %v2799, %v2792
  %v3003 = vpack.c.b16 %v2800, %v2793
  %v3004 = vpack.c.b16 %v2808, %v2801
  %v3005 = vpack.c.b16 %v2809, %v2802
  %v3006 = vpack.c.b16 %v2810, %v2803
  %v3007 = vpack.c.b16 %v2811, %v2804
  %v3008 = vpack.c.b16 %v2812, %v2805
  %v3009 = vpack.c.b16 %v2813, %v2806
  %v3010 = vpack.c.b16 %v2814, %v2807
  %v3011 = vpack.c.b16 %v2822, %v2815
  %v3012 = vpack.c.b16 %v2823, %v2816
  %v3013 = vpack.c.b16 %v2824, %v2817
  %v3014 = vpack.c.b16 %v2825, %v2818
  %v3015 = vpack.c.b16 %v2826, %v2819
  %v3016 = vpack.c.b16 %v2827, %v2820
  %v3017 = vpack.c.b16 %v2828, %v2821
  %v3018 = vpack.c.b16 %v2836, %v2829
  %v3019 = vpack.c.b16 %v2837, %v2830
  %v3020 = vpack.c.b16 %v2838, %v2831
  %v3021 = vpack.c.b16 %v2839, %v2832
  %v3022 = vpack.c.b16 %v2840, %v2833
  %v3023 = vpack.c.b16 %v2841, %v2834
  %v3024 = vpack.c.b16 %v2842, %v2835
  %v3025 = vpack.c.b16 %v2850, %v2843
  %v3026 = vpack.c.b16 %v2851, %v2844
  %v3027 = vpack.c.b16 %v2852, %v2845
  %v3028 = vpack.c.b16 %v2853, %v2846
  %v3029 = vpack.c.b16 %v2854, %v2847
  %v3030 = vpack.c.b16 %v2855, %v2848
  %v3031 = vpack.c.b16 %v2856, %v2849
  %v3208 = vsel %vm1264, %v2069, 0
  %3210 = vmatprep.subr.bf16.mxu0 %v2858
  %3211 = vmatpush1.bf16.msra.mxu0 %v2857
  %3212 = vmatprep.subr.bf16.mxu0 %v2865
  %3213 = vmatpush1.bf16.msra.mxu0 %v2864
  %3214 = vmatprep.subr.bf16.mxu0 %v2872
  %3215 = vmatpush1.bf16.msra.mxu0 %v2871
  %3216 = vmatprep.subr.bf16.mxu0 %v2879
  %3217 = vmatpush1.bf16.msra.mxu0 %v2878
  %3218 = vmatprep.subr.bf16.mxu0 %v2886
  %3219 = vmatpush1.bf16.msra.mxu0 %v2885
  %3220 = vmatprep.subr.bf16.mxu0 %v2893
  %3221 = vmatpush1.bf16.msra.mxu0 %v2892
  %3222 = vmatprep.subr.bf16.mxu0 %v2900
  %3223 = vmatpush1.bf16.msra.mxu0 %v2899
  %3224 = vmatprep.subr.bf16.mxu0 %v2907
  %3225 = vmatpush1.bf16.msra.mxu0 %v2906
  %3226 = vmatprep.subr.bf16.mxu0 %v2914
  %3227 = vmatpush1.bf16.msra.mxu0 %v2913
  %3228 = vmatprep.subr.bf16.mxu0 %v2921
  %3229 = vmatpush1.bf16.msra.mxu0 %v2920
  %3230 = vmatprep.subr.bf16.mxu0 %v2928
  %3231 = vmatpush1.bf16.msra.mxu0 %v2927
  %3232 = vmatprep.subr.bf16.mxu0 %v2935
  %3233 = vmatpush1.bf16.msra.mxu0 %v2934
  %3234 = vmatprep.subr.bf16.mxu0 %v2942
  %3235 = vmatpush1.bf16.msra.mxu0 %v2941
  %3236 = vmatprep.subr.bf16.mxu0 %v2949
  %3237 = vmatpush1.bf16.msra.mxu0 %v2948
  %3238 = vmatprep.subr.bf16.mxu0 %v2956
  %3239 = vmatpush1.bf16.msra.mxu0 %v2955
  %3240 = vmatprep.subr.bf16.mxu0 %v2963
  %3241 = vmatpush1.bf16.msra.mxu0 %v2962
  %3242 = vmatprep.mubr.bf16.mxu0 %v2067
  %3243 = vmatmul.mubr.bf16.gmra.mrb[0].mxu0 %v2066
  %v3244 = vpop.f32.mrb[0].mxu0
  %v3245 = vadd.f32 %v2275, %v3244
  %v3246 = vpop.f32.mrb[0].mxu0
  %v3247 = vadd.f32 %v2279, %v3246
  %v3248 = vpop.f32.mrb[0].mxu0
  %v3249 = vpop.f32.mrb[0].mxu0
  %3250 = vdwg.mxu0
  %3251 = vmatprep.subr.bf16.mxu0 %v2970
  %3252 = vmatpush1.bf16.msra.mxu0 %v2969
  %3253 = vmatprep.subr.bf16.mxu0 %v2977
  %3254 = vmatpush1.bf16.msra.mxu0 %v2976
  %3255 = vmatprep.subr.bf16.mxu0 %v2984
  %3256 = vmatpush1.bf16.msra.mxu0 %v2983
  %3257 = vmatprep.subr.bf16.mxu0 %v2991
  %3258 = vmatpush1.bf16.msra.mxu0 %v2990
  %3259 = vmatprep.subr.bf16.mxu0 %v2998
  %3260 = vmatpush1.bf16.msra.mxu0 %v2997
  %3261 = vmatprep.subr.bf16.mxu0 %v3005
  %3262 = vmatpush1.bf16.msra.mxu0 %v3004
  %3263 = vmatprep.subr.bf16.mxu0 %v3012
  %3264 = vmatpush1.bf16.msra.mxu0 %v3011
  %3265 = vmatprep.subr.bf16.mxu0 %v3019
  %3266 = vmatpush1.bf16.msra.mxu0 %v3018
  %3267 = vmatprep.subr.bf16.mxu0 %v3026
  %3268 = vmatpush1.bf16.msra.mxu0 %v3025
  %3269 = vmatprep.subr.bf16.mxu0 0
  %3270 = vmatpush1.bf16.msra.mxu0 0
  %3271 = vmatprep.subr.bf16.mxu0 0
  %3272 = vmatpush1.bf16.msra.mxu0 0
  %3273 = vmatprep.subr.bf16.mxu0 0
  %3274 = vmatpush1.bf16.msra.mxu0 0
  %3275 = vmatprep.subr.bf16.mxu0 0
  %3276 = vmatpush1.bf16.msra.mxu0 0
  %3277 = vmatprep.subr.bf16.mxu0 0
  %3278 = vmatpush1.bf16.msra.mxu0 0
  %3279 = vmatprep.subr.bf16.mxu0 0
  %3280 = vmatpush1.bf16.msra.mxu0 0
  %3281 = vmatprep.subr.bf16.mxu0 0
  %3282 = vmatpush1.bf16.msra.mxu0 0
  %3283 = vmatprep.mubr.bf16.mxu0 %v3208
  %3284 = vmatmul.mubr.bf16.gmra.mrb[0].mxu0 %v2068
  %v3285 = vpop.f32.mrb[0].mxu0
  %v3286 = vadd.f32 %v3245, %v3285
  %v3287 = vpop.f32.mrb[0].mxu0
  %v3288 = vadd.f32 %v3247, %v3287
  %v3289 = vpop.f32.mrb[0].mxu0
  %v3290 = vpop.f32.mrb[0].mxu0
  %3291 = vdwg.mxu0
  %3292 = vmatprep.subr.bf16.mxu0 %v2860
  %3293 = vmatpush1.bf16.msra.mxu0 %v2859
  %3294 = vmatprep.subr.bf16.mxu0 %v2867
  %3295 = vmatpush1.bf16.msra.mxu0 %v2866
  %3296 = vmatprep.subr.bf16.mxu0 %v2874
  %3297 = vmatpush1.bf16.msra.mxu0 %v2873
  %3298 = vmatprep.subr.bf16.mxu0 %v2881
  %3299 = vmatpush1.bf16.msra.mxu0 %v2880
  %3300 = vmatprep.subr.bf16.mxu0 %v2888
  %3301 = vmatpush1.bf16.msra.mxu0 %v2887
  %3302 = vmatprep.subr.bf16.mxu0 %v2895
  %3303 = vmatpush1.bf16.msra.mxu0 %v2894
  %3304 = vmatprep.subr.bf16.mxu0 %v2902
  %3305 = vmatpush1.bf16.msra.mxu0 %v2901
  %3306 = vmatprep.subr.bf16.mxu0 %v2909
  %3307 = vmatpush1.bf16.msra.mxu0 %v2908
  %3308 = vmatprep.subr.bf16.mxu0 %v2916
  %3309 = vmatpush1.bf16.msra.mxu0 %v2915
  %3310 = vmatprep.subr.bf16.mxu0 %v2923
  %3311 = vmatpush1.bf16.msra.mxu0 %v2922
  %3312 = vmatprep.subr.bf16.mxu0 %v2930
  %3313 = vmatpush1.bf16.msra.mxu0 %v2929
  %3314 = vmatprep.subr.bf16.mxu0 %v2937
  %3315 = vmatpush1.bf16.msra.mxu0 %v2936
  %3316 = vmatprep.subr.bf16.mxu0 %v2944
  %3317 = vmatpush1.bf16.msra.mxu0 %v2943
  %3318 = vmatprep.subr.bf16.mxu0 %v2951
  %3319 = vmatpush1.bf16.msra.mxu0 %v2950
  %3320 = vmatprep.subr.bf16.mxu0 %v2958
  %3321 = vmatpush1.bf16.msra.mxu0 %v2957
  %3322 = vmatprep.subr.bf16.mxu0 %v2965
  %3323 = vmatpush1.bf16.msra.mxu0 %v2964
  %3324 = vmatprep.mubr.bf16.mxu0 %v2067
  %3325 = vmatmul.mubr.bf16.gmra.mrb[0].mxu0 %v2066
  %v3326 = vpop.f32.mrb[0].mxu0
  %v3327 = vadd.f32 %v2283, %v3326
  %v3328 = vpop.f32.mrb[0].mxu0
  %v3329 = vadd.f32 %v2287, %v3328
  %v3330 = vpop.f32.mrb[0].mxu0
  %v3331 = vpop.f32.mrb[0].mxu0
  %3332 = vdwg.mxu0
  %3333 = vmatprep.subr.bf16.mxu0 %v2972
  %3334 = vmatpush1.bf16.msra.mxu0 %v2971
  %3335 = vmatprep.subr.bf16.mxu0 %v2979
  %3336 = vmatpush1.bf16.msra.mxu0 %v2978
  %3337 = vmatprep.subr.bf16.mxu0 %v2986
  %3338 = vmatpush1.bf16.msra.mxu0 %v2985
  %3339 = vmatprep.subr.bf16.mxu0 %v2993
  %3340 = vmatpush1.bf16.msra.mxu0 %v2992
  %3341 = vmatprep.subr.bf16.mxu0 %v3000
  %3342 = vmatpush1.bf16.msra.mxu0 %v2999
  %3343 = vmatprep.subr.bf16.mxu0 %v3007
  %3344 = vmatpush1.bf16.msra.mxu0 %v3006
  %3345 = vmatprep.subr.bf16.mxu0 %v3014
  %3346 = vmatpush1.bf16.msra.mxu0 %v3013
  %3347 = vmatprep.subr.bf16.mxu0 %v3021
  %3348 = vmatpush1.bf16.msra.mxu0 %v3020
  %3349 = vmatprep.subr.bf16.mxu0 %v3028
  %3350 = vmatpush1.bf16.msra.mxu0 %v3027
  %3351 = vmatprep.subr.bf16.mxu0 0
  %3352 = vmatpush1.bf16.msra.mxu0 0
  %3353 = vmatprep.subr.bf16.mxu0 0
  %3354 = vmatpush1.bf16.msra.mxu0 0
  %3355 = vmatprep.subr.bf16.mxu0 0
  %3356 = vmatpush1.bf16.msra.mxu0 0
  %3357 = vmatprep.subr.bf16.mxu0 0
  %3358 = vmatpush1.bf16.msra.mxu0 0
  %3359 = vmatprep.subr.bf16.mxu0 0
  %3360 = vmatpush1.bf16.msra.mxu0 0
  %3361 = vmatprep.subr.bf16.mxu0 0
  %3362 = vmatpush1.bf16.msra.mxu0 0
  %3363 = vmatprep.subr.bf16.mxu0 0
  %3364 = vmatpush1.bf16.msra.mxu0 0
  %3365 = vmatprep.mubr.bf16.mxu0 %v3208
  %3366 = vmatmul.mubr.bf16.gmra.mrb[0].mxu0 %v2068
  %v3367 = vpop.f32.mrb[0].mxu0
  %v3368 = vadd.f32 %v3327, %v3367
  %v3369 = vpop.f32.mrb[0].mxu0
  %v3370 = vadd.f32 %v3329, %v3369
  %v3371 = vpop.f32.mrb[0].mxu0
  %v3372 = vpop.f32.mrb[0].mxu0
  %3373 = vdwg.mxu0
  %3374 = vmatprep.subr.bf16.mxu0 %v2862
  %3375 = vmatpush1.bf16.msra.mxu0 %v2861
  %3376 = vmatprep.subr.bf16.mxu0 %v2869
  %3377 = vmatpush1.bf16.msra.mxu0 %v2868
  %3378 = vmatprep.subr.bf16.mxu0 %v2876
  %3379 = vmatpush1.bf16.msra.mxu0 %v2875
  %3380 = vmatprep.subr.bf16.mxu0 %v2883
  %3381 = vmatpush1.bf16.msra.mxu0 %v2882
  %3382 = vmatprep.subr.bf16.mxu0 %v2890
  %3383 = vmatpush1.bf16.msra.mxu0 %v2889
  %3384 = vmatprep.subr.bf16.mxu0 %v2897
  %3385 = vmatpush1.bf16.msra.mxu0 %v2896
  %3386 = vmatprep.subr.bf16.mxu0 %v2904
  %3387 = vmatpush1.bf16.msra.mxu0 %v2903
  %3388 = vmatprep.subr.bf16.mxu0 %v2911
  %3389 = vmatpush1.bf16.msra.mxu0 %v2910
  %3390 = vmatprep.subr.bf16.mxu0 %v2918
  %3391 = vmatpush1.bf16.msra.mxu0 %v2917
  %3392 = vmatprep.subr.bf16.mxu0 %v2925
  %3393 = vmatpush1.bf16.msra.mxu0 %v2924
  %3394 = vmatprep.subr.bf16.mxu0 %v2932
  %3395 = vmatpush1.bf16.msra.mxu0 %v2931
  %3396 = vmatprep.subr.bf16.mxu0 %v2939
  %3397 = vmatpush1.bf16.msra.mxu0 %v2938
  %3398 = vmatprep.subr.bf16.mxu0 %v2946
  %3399 = vmatpush1.bf16.msra.mxu0 %v2945
  %3400 = vmatprep.subr.bf16.mxu0 %v2953
  %3401 = vmatpush1.bf16.msra.mxu0 %v2952
  %3402 = vmatprep.subr.bf16.mxu0 %v2960
  %3403 = vmatpush1.bf16.msra.mxu0 %v2959
  %3404 = vmatprep.subr.bf16.mxu0 %v2967
  %3405 = vmatpush1.bf16.msra.mxu0 %v2966
  %3406 = vmatprep.mubr.bf16.mxu0 %v2067
  %3407 = vmatmul.mubr.bf16.gmra.mrb[0].mxu0 %v2066
  %v3408 = vpop.f32.mrb[0].mxu0
  %v3409 = vadd.f32 %v2291, %v3408
  %v3410 = vpop.f32.mrb[0].mxu0
  %v3411 = vadd.f32 %v2295, %v3410
  %v3412 = vpop.f32.mrb[0].mxu0
  %v3413 = vpop.f32.mrb[0].mxu0
  %3414 = vdwg.mxu0
  %3415 = vmatprep.subr.bf16.mxu0 %v2974
  %3416 = vmatpush1.bf16.msra.mxu0 %v2973
  %3417 = vmatprep.subr.bf16.mxu0 %v2981
  %3418 = vmatpush1.bf16.msra.mxu0 %v2980
  %3419 = vmatprep.subr.bf16.mxu0 %v2988
  %3420 = vmatpush1.bf16.msra.mxu0 %v2987
  %3421 = vmatprep.subr.bf16.mxu0 %v2995
  %3422 = vmatpush1.bf16.msra.mxu0 %v2994
  %3423 = vmatprep.subr.bf16.mxu0 %v3002
  %3424 = vmatpush1.bf16.msra.mxu0 %v3001
  %3425 = vmatprep.subr.bf16.mxu0 %v3009
  %3426 = vmatpush1.bf16.msra.mxu0 %v3008
  %3427 = vmatprep.subr.bf16.mxu0 %v3016
  %3428 = vmatpush1.bf16.msra.mxu0 %v3015
  %3429 = vmatprep.subr.bf16.mxu0 %v3023
  %3430 = vmatpush1.bf16.msra.mxu0 %v3022
  %3431 = vmatprep.subr.bf16.mxu0 %v3030
  %3432 = vmatpush1.bf16.msra.mxu0 %v3029
  %3433 = vmatprep.subr.bf16.mxu0 0
  %3434 = vmatpush1.bf16.msra.mxu0 0
  %3435 = vmatprep.subr.bf16.mxu0 0
  %3436 = vmatpush1.bf16.msra.mxu0 0
  %3437 = vmatprep.subr.bf16.mxu0 0
  %3438 = vmatpush1.bf16.msra.mxu0 0
  %3439 = vmatprep.subr.bf16.mxu0 0
  %3440 = vmatpush1.bf16.msra.mxu0 0
  %3441 = vmatprep.subr.bf16.mxu0 0
  %3442 = vmatpush1.bf16.msra.mxu0 0
  %3443 = vmatprep.subr.bf16.mxu0 0
  %3444 = vmatpush1.bf16.msra.mxu0 0
  %3445 = vmatprep.subr.bf16.mxu0 0
  %3446 = vmatpush1.bf16.msra.mxu0 0
  %3447 = vmatprep.mubr.bf16.mxu0 %v3208
  %3448 = vmatmul.mubr.bf16.gmra.mrb[0].mxu0 %v2068
  %v3449 = vpop.f32.mrb[0].mxu0
  %v3450 = vadd.f32 %v3409, %v3449
  %v3451 = vpop.f32.mrb[0].mxu0
  %v3452 = vadd.f32 %v3411, %v3451
  %v3453 = vpop.f32.mrb[0].mxu0
  %v3454 = vpop.f32.mrb[0].mxu0
  %3455 = vdwg.mxu0
  %3456 = vmatprep.subr.bf16.mxu0 0
  %3457 = vmatpush1.bf16.msra.mxu0 %v2863
  %3458 = vmatprep.subr.bf16.mxu0 0
  %3459 = vmatpush1.bf16.msra.mxu0 %v2870
  %3460 = vmatprep.subr.bf16.mxu0 0
  %3461 = vmatpush1.bf16.msra.mxu0 %v2877
  %3462 = vmatprep.subr.bf16.mxu0 0
  %3463 = vmatpush1.bf16.msra.mxu0 %v2884
  %3464 = vmatprep.subr.bf16.mxu0 0
  %3465 = vmatpush1.bf16.msra.mxu0 %v2891
  %3466 = vmatprep.subr.bf16.mxu0 0
  %3467 = vmatpush1.bf16.msra.mxu0 %v2898
  %3468 = vmatprep.subr.bf16.mxu0 0
  %3469 = vmatpush1.bf16.msra.mxu0 %v2905
  %3470 = vmatprep.subr.bf16.mxu0 0
  %3471 = vmatpush1.bf16.msra.mxu0 %v2912
  %3472 = vmatprep.subr.bf16.mxu0 0
  %3473 = vmatpush1.bf16.msra.mxu0 %v2919
  %3474 = vmatprep.subr.bf16.mxu0 0
  %3475 = vmatpush1.bf16.msra.mxu0 %v2926
  %3476 = vmatprep.subr.bf16.mxu0 0
  %3477 = vmatpush1.bf16.msra.mxu0 %v2933
  %3478 = vmatprep.subr.bf16.mxu0 0
  %3479 = vmatpush1.bf16.msra.mxu0 %v2940
  %3480 = vmatprep.subr.bf16.mxu0 0
  %3481 = vmatpush1.bf16.msra.mxu0 %v2947
  %3482 = vmatprep.subr.bf16.mxu0 0
  %3483 = vmatpush1.bf16.msra.mxu0 %v2954
  %3484 = vmatprep.subr.bf16.mxu0 0
  %3485 = vmatpush1.bf16.msra.mxu0 %v2961
  %3486 = vmatprep.subr.bf16.mxu0 0
  %3487 = vmatpush1.bf16.msra.mxu0 %v2968
  %3488 = vmatprep.mubr.bf16.mxu0 %v2067
  %3489 = vmatmul.mubr.bf16.gmra.mrb[0].mxu0 %v2066
  %v3490 = vpop.f32.mrb[0].mxu0
  %v3491 = vadd.f32 %v2299, %v3490
  %v3492 = vpop.f32.mrb[0].mxu0
  %v3493 = vpop.f32.mrb[0].mxu0
  %v3494 = vpop.f32.mrb[0].mxu0
  %3495 = vdwg.mxu0
  %3496 = vmatprep.subr.bf16.mxu0 0
  %3497 = vmatpush1.bf16.msra.mxu0 %v2975
  %3498 = vmatprep.subr.bf16.mxu0 0
  %3499 = vmatpush1.bf16.msra.mxu0 %v2982
  %3500 = vmatprep.subr.bf16.mxu0 0
  %3501 = vmatpush1.bf16.msra.mxu0 %v2989
  %3502 = vmatprep.subr.bf16.mxu0 0
  %3503 = vmatpush1.bf16.msra.mxu0 %v2996
  %3504 = vmatprep.subr.bf16.mxu0 0
  %3505 = vmatpush1.bf16.msra.mxu0 %v3003
  %3506 = vmatprep.subr.bf16.mxu0 0
  %3507 = vmatpush1.bf16.msra.mxu0 %v3010
  %3508 = vmatprep.subr.bf16.mxu0 0
  %3509 = vmatpush1.bf16.msra.mxu0 %v3017
  %3510 = vmatprep.subr.bf16.mxu0 0
  %3511 = vmatpush1.bf16.msra.mxu0 %v3024
  %3512 = vmatprep.subr.bf16.mxu0 0
  %3513 = vmatpush1.bf16.msra.mxu0 %v3031
  %3514 = vmatprep.subr.bf16.mxu0 0
  %3515 = vmatpush1.bf16.msra.mxu0 0
  %3516 = vmatprep.subr.bf16.mxu0 0
  %3517 = vmatpush1.bf16.msra.mxu0 0
  %3518 = vmatprep.subr.bf16.mxu0 0
  %3519 = vmatpush1.bf16.msra.mxu0 0
  %3520 = vmatprep.subr.bf16.mxu0 0
  %3521 = vmatpush1.bf16.msra.mxu0 0
  %3522 = vmatprep.subr.bf16.mxu0 0
  %3523 = vmatpush1.bf16.msra.mxu0 0
  %3524 = vmatprep.subr.bf16.mxu0 0
  %3525 = vmatpush1.bf16.msra.mxu0 0
  %3526 = vmatprep.subr.bf16.mxu0 0
  %3527 = vmatpush1.bf16.msra.mxu0 0
  %3528 = vmatprep.mubr.bf16.mxu0 %v3208
  %3529 = vmatmul.mubr.bf16.gmra.mrb[0].mxu0 %v2068
  %v3530 = vpop.f32.mrb[0].mxu0
  %v3531 = vadd.f32 %v3491, %v3530
  %v3532 = vpop.f32.mrb[0].mxu0
  %v3533 = vpop.f32.mrb[0].mxu0
  %v3534 = vpop.f32.mrb[0].mxu0
  %3535 = vdwg.mxu0
  %v3536 = vsub.f32 0.0, %v3286
  %v3537 = vsub.f32 0.0, %v3288
  %v3538 = vsub.f32 0.0, %v3368
  %v3539 = vsub.f32 0.0, %v3370
  %v3540 = vsub.f32 0.0, %v3450
  %v3541 = vsub.f32 0.0, %v3452
  %v3542 = vsub.f32 0.0, %v3531
  %v3543 = vmul.f32 %v3536, 1.442695
  %v3544 = vpow.pop %v3543
  %v3545 = vmul.f32 %v3537, 1.442695
  %v3546 = vpow.pop %v3545
  %v3547 = vmul.f32 %v3538, 1.442695
  %v3548 = vpow.pop %v3547
  %v3549 = vmul.f32 %v3539, 1.442695
  %v3550 = vpow.pop %v3549
  %v3551 = vmul.f32 %v3540, 1.442695
  %v3552 = vpow.pop %v3551
  %v3553 = vmul.f32 %v3541, 1.442695
  %v3554 = vpow.pop %v3553
  %v3555 = vmul.f32 %v3542, 1.442695
  %v3556 = vpow.pop %v3555
  %v3557 = vadd.f32 %v3544, 1.0
  %v3558 = vadd.f32 %v3546, 1.0
  %v3559 = vadd.f32 %v3548, 1.0
  %v3560 = vadd.f32 %v3550, 1.0
  %v3561 = vadd.f32 %v3552, 1.0
  %v3562 = vadd.f32 %v3554, 1.0
  %v3563 = vadd.f32 %v3556, 1.0
  %v3564 = vrcp.pop %v3557
  %v3565 = vrcp.pop %v3558
  %v3566 = vrcp.pop %v3559
  %v3567 = vrcp.pop %v3560
  %v3568 = vrcp.pop %v3561
  %v3569 = vrcp.pop %v3562
  %v3570 = vrcp.pop %v3563
  %3571 = vst [vmem:[%s10] sm:$0xff] %v3564
  %3572 = vst [vmem:[%s10 + $0x8] sm:$0xff] %v3565
  %3573 = vst [vmem:[%s10 + $0x10] sm:$0xff] %v3566
  %3574 = vst [vmem:[%s10 + $0x18] sm:$0xff] %v3567
  %3575 = vst [vmem:[%s10 + $0x20] sm:$0xff] %v3568
  %3576 = vst [vmem:[%s10 + $0x28] sm:$0xff] %v3569
  %3577 = vst.msk [vmem:[%s10 + $0x30] sm:$0xff] %vm1264, %v3570
  %3579 = vrot.lane.b32.xlu0 %v1903, 40
  %v3580 = vpop.permute.xlu0 %3579
  %vm3582 = vcmask 326656
  %v3583 = vsel %vm3582, %v1889, %v3580
  %vm3584 = vcmask 490496
  %3585 = vst.msk [vmem:[%s11] sm:$0xff] %vm3584, %v3583
  // Predicated region
  $region42: #{vae_forward.1} parent=0 // pred_check
    _
  $region43: #{vae_forward.1} parent=0 // pred_check_branch
    %3587 = sbr.rel (0) target = $region45
  $region44: #{vae_forward.1} parent=0 // pred_region
    _
  $region45: #{vae_forward.1} parent=0 // pred_fallthru
    _
  // Predicated region
  $region46: #{vae_forward.1} parent=0 // pred_check
    _
  $region47: #{vae_forward.1} parent=0 // pred_check_branch
    %3589 = sbr.rel (0) target = $region49
  $region48: #{vae_forward.1} parent=0 // pred_region
    _
  $region49: #{vae_forward.1} parent=0 // pred_fallthru
    _
  // Predicated region
  $region50: #{vae_forward.1} parent=0 // pred_check
    _
  $region51: #{vae_forward.1} parent=0 // pred_check_branch
    %3591 = sbr.rel (0) target = $region53
  $region52: #{vae_forward.1} parent=0 // pred_region
    _
  $region53: #{vae_forward.1} parent=0 // pred_fallthru
    _
  // Predicated region
  $region54: #{vae_forward.1} parent=0 // pred_check
    _
  $region55: #{vae_forward.1} parent=0 // pred_check_branch
    %3593 = sbr.rel (0) target = $region57
  $region56: #{vae_forward.1} parent=0 // pred_region
    _
  $region57: #{vae_forward.1} parent=0 // pred_fallthru
    _

</llo_original>
